<compile_context>
chip_gen: v7x
topology: tpu7x:2x2x1
jax: 0.10.0
libtpu: 0.0.40
codegen_flags: <defaults>
</compile_context>

<pallas_src>
import jax
import jax.numpy as jnp
from jax import lax
from jax.experimental import pallas as pl
from jax.experimental.pallas import tpu as pltpu


def _round_up(x, m):
    return (x + m - 1) // m * m


# --------------------------------------------------------------------------
# Kernel
# --------------------------------------------------------------------------
def _bilstm_classifier_kernel(
        wf_ref, wb_ref,                  # (Tc*B, E) fwd / bwd-step-ordered streams (bf16)
        wih_f_ref, b_f_ref,              # (E, 4H) bf16, (1, 4H) f32 — cols [i f o g]
        wih_b_ref, b_b_ref,              # (E, 4H) bf16, (1, 4H) f32 — cols [i f o g]
        whh_ref,                         # (2H, 8H) f32, fused layout [i_f i_b|f_f f_b|o_f o_b|g_f g_b]
        w1_ref, b1_ref,                  # (2H, d_ff_p), (1, d_ff_p)
        w2_ref, b2_ref,                  # (d_ff_p, d_out_p), (1, d_out_p)
        out_ref,                         # (B, d_out_p)
        h_ref, c_ref,                    # (B, 2H) carried [fwd | bwd]
        pg_ref):                         # (Tc*B, 8H) fused pre-gates for the chunk
    step_i = pl.program_id(0)
    n_steps = pl.num_programs(0)
    TCB = wf_ref.shape[0]
    H4 = wih_f_ref.shape[1]
    H = H4 // 4
    B = h_ref.shape[0]
    TC = TCB // B                        # timesteps in this chunk (static)

    @pl.when(step_i == 0)
    def _():
        h_ref[...] = jnp.zeros_like(h_ref)
        c_ref[...] = jnp.zeros_like(c_ref)

    # ---- Hoisted per-chunk input projections (bf16 MXU, f32 accumulate) ----
    pf = jnp.dot(wf_ref[...], wih_f_ref[...],
                 preferred_element_type=jnp.float32) + b_f_ref[...]
    pb = jnp.dot(wb_ref[...], wih_b_ref[...],
                 preferred_element_type=jnp.float32) + b_b_ref[...]
    # Interleave once per chunk into [i_f i_b | f_f f_b | o_f o_b | g_f g_b].
    pg_ref[...] = jnp.concatenate(
        [pf[:, 0 * H:1 * H], pb[:, 0 * H:1 * H],
         pf[:, 1 * H:2 * H], pb[:, 1 * H:2 * H],
         pf[:, 2 * H:3 * H], pb[:, 2 * H:3 * H],
         pf[:, 3 * H:4 * H], pb[:, 3 * H:4 * H]], axis=1)

    whh = whh_ref[...]                   # (2H, 8H)

    def body(s, carry):
        h, c = carry                                               # (B, 2H) each
        rec = jnp.dot(h, whh, preferred_element_type=jnp.float32)  # (B, 8H)
        row = pl.multiple_of(s * B, B)
        gates = pg_ref[pl.ds(row, B), :] + rec                     # fused layout
        sig = jax.nn.sigmoid(gates[:, :6 * H])                     # i, f, o lanes
        g_g = jnp.tanh(gates[:, 6 * H:])                           # g lanes
        i_g = sig[:, 0 * H:2 * H]
        f_g = sig[:, 2 * H:4 * H]
        o_g = sig[:, 4 * H:6 * H]
        c_new = f_g * c + i_g * g_g
        h_new = o_g * jnp.tanh(c_new)
        return (h_new, c_new)

    h_fin, c_fin = lax.fori_loop(0, TC, body, (h_ref[...], c_ref[...]),
                                 unroll=min(TC, 8))
    h_ref[...] = h_fin
    c_ref[...] = c_fin

    @pl.when(step_i == n_steps - 1)
    def _():
        # h_fin == [h_fwd | h_bwd] == torch.cat((h[0], h[1]), dim=1)
        hid = jnp.maximum(
            jnp.dot(h_fin, w1_ref[...], preferred_element_type=jnp.float32)
            + b1_ref[...], 0.0)
        out = jnp.dot(hid, w2_ref[...], preferred_element_type=jnp.float32) + b2_ref[...]
        out_ref[...] = out.astype(out_ref.dtype)


# --------------------------------------------------------------------------
# Wrapper-side packing / sizing helpers
# --------------------------------------------------------------------------
def _vmem_caps():
    """(physical VMEM bytes, safe scoped limit) — chip-adaptive with fallback."""
    try:
        cap = int(pltpu.get_tpu_info().vmem_capacity_bytes)
    except Exception:
        cap = 64 * 1024 * 1024
    limit = min(cap - 16 * 1024 * 1024, 100 * 1024 * 1024)   # 48 MiB on v7x, 100 MiB v5e/v6e
    return cap, max(limit, 32 * 1024 * 1024)


def _pick_t_chunk(T, B_pad, per_t_bytes, budget_bytes, requested=None):
    """Largest divisor of T whose streamed footprint fits and keeps aligned rows."""
    max_tc = max(1, budget_bytes // max(per_t_bytes, 1))

    def ok(d):
        # (16,128)-safe row count (covers bf16 packing), or block == full array.
        return d == T or (d * B_pad) % 16 == 0

    divs = [d for d in range(1, T + 1) if T % d == 0]
    cands = [d for d in divs if d <= max_tc and ok(d)]
    if requested is not None and requested in cands:
        return requested
    if cands:
        return cands[-1]
    return T   # full-sequence block is always layout-legal; limit is raised to fit.


def _pack_params(params, stream_dtype):
    """Permute/pack weights for the fused per-gate-contiguous kernel layout."""
    H = params["whh_f"].shape[0]
    d_ff = params["w1"].shape[1]
    d_out = params["w2"].shape[1]

    # PyTorch gate order is [i f g o]; kernel gate-group order is [i f o g]
    def perm_ifog(w):
        return jnp.concatenate([w[..., 0:2 * H], w[..., 3 * H:4 * H],
                                w[..., 2 * H:3 * H]], axis=-1)

    wih_f = perm_ifog(params["wih_f"]).astype(stream_dtype)
    wih_b = perm_ifog(params["wih_b"]).astype(stream_dtype)
    b_f = perm_ifog(params["b_f"]).astype(jnp.float32)
    b_b = perm_ifog(params["b_b"]).astype(jnp.float32)

    # Recurrent weight: rows [h_f ; h_b] -> fused columns [i_f i_b|f_f f_b|o_f o_b|g_f g_b]
    whh = jnp.zeros((2 * H, 8 * H), jnp.float32)
    for gdst, gsrc in enumerate([0, 1, 3, 2]):          # i, f, o, g out of [i f g o]
        whh = whh.at[:H, gdst * 2 * H:gdst * 2 * H + H].set(
            params["whh_f"][:, gsrc * H:(gsrc + 1) * H])
        whh = whh.at[H:, gdst * 2 * H + H:(gdst + 1) * 2 * H].set(
            params["whh_b"][:, gsrc * H:(gsrc + 1) * H])

    d_ff_p = _round_up(d_ff, 128)
    d_out_p = _round_up(d_out, 128)
    w1p = jnp.zeros((2 * H, d_ff_p), jnp.float32).at[:, :d_ff].set(params["w1"])
    b1p = jnp.zeros((1, d_ff_p), jnp.float32).at[:, :d_ff].set(params["b1"])
    w2p = jnp.zeros((d_ff_p, d_out_p), jnp.float32).at[:d_ff, :d_out].set(params["w2"])
    b2p = jnp.zeros((1, d_out_p), jnp.float32).at[:, :d_out].set(params["b2"])
    return wih_f, b_f, wih_b, b_b, whh, w1p, b1p, w2p, b2p, d_ff_p, d_out_p, d_ff, d_out


# --------------------------------------------------------------------------
# Forward wrapper
# --------------------------------------------------------------------------
def classifier_forward(tokens, params, t_chunk=None, stream_dtype=jnp.bfloat16):
    """tokens: (T, B) int32 (seq-major, batch_first=False).  Returns logits (B, d_out)."""
    T, B = tokens.shape
    w = params["embed"][tokens]                              # (T, B, E) gather — JAX glue
    E = w.shape[-1]
    H = params["whh_f"].shape[0]
    H4 = 4 * H

    # Pad batch to full sublanes; padded rows are independent and sliced off.
    B_pad = max(8, _round_up(B, 8))
    if B_pad != B:
        w = jnp.concatenate([w, jnp.zeros((T, B_pad - B, E), w.dtype)], axis=1)

    w = w.astype(stream_dtype)
    w_fwd = w.reshape(T * B_pad, E)                          # forward step order
    w_bwd = jnp.flip(w, axis=0).reshape(T * B_pad, E)        # backward step order

    (wih_f, b_f, wih_b, b_b, whh, w1p, b1p, w2p, b2p,
     d_ff_p, d_out_p, _, d_out) = _pack_params(params, stream_dtype)

    # ---- VMEM accounting (resident weights + pipeline buffers + scratch) ----
    sb = jnp.dtype(stream_dtype).itemsize
    fixed = (2 * (E * H4 * sb) * 2                # wih_f / wih_b, double-buffered
             + 2 * (8 * H4 * 4) * 2               # biases (sublane-padded)
             + (2 * H) * (8 * H) * 4 * 2          # whh
             + (2 * H) * d_ff_p * 4 * 2 + 8 * d_ff_p * 4 * 2
             + d_ff_p * d_out_p * 4 * 2 + 8 * d_out_p * 4 * 2
             + B_pad * d_out_p * 4 * 2            # output block
             + 2 * B_pad * 2 * H * 4)             # h / c scratch
    per_t = 2 * 2 * B_pad * E * sb + B_pad * 8 * H * 4       # streams (2x dbl-buf) + pgates

    cap, vmem_limit = _vmem_caps()
    budget = max(vmem_limit - fixed - 4 * 1024 * 1024, per_t)

    t_chunk = _pick_t_chunk(T, B_pad, per_t, budget, requested=t_chunk)
    n_chunks = T // t_chunk
    R = t_chunk * B_pad

    est = fixed + per_t * t_chunk + 4 * 1024 * 1024
    vmem_limit = min(max(vmem_limit, est), cap - 8 * 1024 * 1024)

    fwd_map = lambda i: (i, 0)
    fixed_map = lambda i: (0, 0)

    grid_spec = pltpu.PrefetchScalarGridSpec(
        num_scalar_prefetch=0,
        grid=(n_chunks,),
        in_specs=[
            pl.BlockSpec((R, E), fwd_map),                   # forward stream
            pl.BlockSpec((R, E), fwd_map),                   # backward-step-order stream
            pl.BlockSpec((E, H4), fixed_map),
            pl.BlockSpec((1, H4), fixed_map),
            pl.BlockSpec((E, H4), fixed_map),
            pl.BlockSpec((1, H4), fixed_map),
            pl.BlockSpec((2 * H, 8 * H), fixed_map),
            pl.BlockSpec((2 * H, d_ff_p), fixed_map),
            pl.BlockSpec((1, d_ff_p), fixed_map),
            pl.BlockSpec((d_ff_p, d_out_p), fixed_map),
            pl.BlockSpec((1, d_out_p), fixed_map),
        ],
        out_specs=pl.BlockSpec((B_pad, d_out_p), fixed_map),
        scratch_shapes=[
            pltpu.VMEM((B_pad, 2 * H), jnp.float32),         # h = [h_fwd | h_bwd]
            pltpu.VMEM((B_pad, 2 * H), jnp.float32),         # c = [c_fwd | c_bwd]
            pltpu.VMEM((R, 8 * H), jnp.float32),             # fused pre-gates per chunk
        ],
    )

    out_p = pl.pallas_call(
        _bilstm_classifier_kernel,
        out_shape=jax.ShapeDtypeStruct((B_pad, d_out_p), jnp.float32),
        grid_spec=grid_spec,
        compiler_params=pltpu.CompilerParams(
            dimension_semantics=("arbitrary",),              # state carried across the T-grid
            vmem_limit_bytes=int(vmem_limit),
        ),
    )(w_fwd, w_bwd, wih_f, b_f, wih_b, b_b, whh, w1p, b1p, w2p, b2p)

    return out_p[:B, :d_out]


# --------------------------------------------------------------------------
# Pure-JAX reference (PyTorch semantics) + init + self-test
# --------------------------------------------------------------------------
def _reference_forward(tokens, params):
    w = params["embed"][tokens].astype(jnp.float32)
    T, B, _ = w.shape
    H = params["whh_f"].shape[0]

    def run(wih, whh, b, seq):
        def step(carry, x_t):
            h, c = carry
            g = x_t @ wih + h @ whh + b[0]
            i = jax.nn.sigmoid(g[:, :H])
            f = jax.nn.sigmoid(g[:, H:2 * H])
            gg = jnp.tanh(g[:, 2 * H:3 * H])
            o = jax.nn.sigmoid(g[:, 3 * H:])
            c = f * c + i * gg
            h = o * jnp.tanh(c)
            return (h, c), None
        (h, _), _ = lax.scan(step, (jnp.zeros((B, H)), jnp.zeros((B, H))), seq)
        return h

    h_f = run(params["wih_f"], params["whh_f"], params["b_f"], w)
    h_b = run(params["wih_b"], params["whh_b"], params["b_b"], w[::-1])
    x = jnp.concatenate([h_f, h_b], axis=1)
    hid = jnp.maximum(x @ params["w1"] + params["b1"][0], 0.0)
    return hid @ params["w2"] + params["b2"][0]


def init_params(key, n_embed, d_embed, d_hidden, d_out):
    d_ff = d_hidden  # Classifier builds FeedForward(2*d_hidden, d_out, d_hidden)
    ks = jax.random.split(key, 12)
    s = 0.1

    def rnd(k, shape):
        return jax.random.normal(k, shape, jnp.float32) * s

    H4 = 4 * d_hidden
    return {
        "embed": rnd(ks[0], (n_embed, d_embed)),
        # pre-transposed weights so kernel matmuls are (rows, in) @ (in, out);
        # gate column order [i f g o] (PyTorch).
        "wih_f": rnd(ks[1], (d_embed, H4)),
        "whh_f": rnd(ks[2], (d_hidden, H4)),
        "b_f":   rnd(ks[3], (1, H4)),          # b_ih + b_hh folded together
        "wih_b": rnd(ks[4], (d_embed, H4)),
        "whh_b": rnd(ks[5], (d_hidden, H4)),
        "b_b":   rnd(ks[6], (1, H4)),
        "w1":    rnd(ks[7], (2 * d_hidden, d_ff)),
        "b1":    rnd(ks[8], (1, d_ff)),
        "w2":    rnd(ks[9], (d_ff, d_out)),
        "b2":    rnd(ks[10], (1, d_out)),
    }


if __name__ == "__main__":
    # Small shapes consistent with the module's forward (seq-major LSTM input).
    T, B = 8, 4
    n_embed, d_embed, d_hidden, d_out = 1000, 32, 32, 2

    key = jax.random.PRNGKey(0)
    k_par, k_tok = jax.random.split(key)
    params = init_params(k_par, n_embed, d_embed, d_hidden, d_out)
    tokens = jax.random.randint(k_tok, (T, B), 0, n_embed, dtype=jnp.int32)

    # t_chunk=4 -> 2 grid steps, exercising the streamed/state-carry path.
    out = classifier_forward(tokens, params, t_chunk=4)
    out = jax.block_until_ready(out)

    ref = _reference_forward(tokens, params)
    assert out.shape == (B, d_out)
    # bf16-streamed activations/input weights -> slightly looser tolerance.
    assert jnp.allclose(out, ref, rtol=2e-2, atol=2e-2)

    print("KERNEL_OK")
</pallas_src>

<mosaic_0001>
module attributes {stable_mosaic.version = 11 : i64} {
  func.func @_bilstm_classifier_kernel(%arg0: i32, %arg1: memref<32x32xbf16, #tpu.memory_space<vmem>>, %arg2: memref<32x32xbf16, #tpu.memory_space<vmem>>, %arg3: memref<32x128xbf16, #tpu.memory_space<vmem>>, %arg4: memref<1x128xf32, #tpu.memory_space<vmem>>, %arg5: memref<32x128xbf16, #tpu.memory_space<vmem>>, %arg6: memref<1x128xf32, #tpu.memory_space<vmem>>, %arg7: memref<64x256xf32, #tpu.memory_space<vmem>>, %arg8: memref<64x128xf32, #tpu.memory_space<vmem>>, %arg9: memref<1x128xf32, #tpu.memory_space<vmem>>, %arg10: memref<128x128xf32, #tpu.memory_space<vmem>>, %arg11: memref<1x128xf32, #tpu.memory_space<vmem>>, %arg12: memref<8x128xf32, #tpu.memory_space<vmem>>, %arg13: memref<8x64xf32, #tpu.memory_space<vmem>>, %arg14: memref<8x64xf32, #tpu.memory_space<vmem>>, %arg15: memref<32x256xf32, #tpu.memory_space<vmem>>) attributes {dimension_semantics = [#tpu.dimension_semantics<arbitrary>], iteration_bounds = array<i64: 2>, scalar_prefetch = 0 : i64, scratch_operands = 3 : i64, tpu.core_type = #tpu.core_type<tc>, window_params = [{transform_indices = @transform_0, window_bounds = array<i64: 32, 32>}, {transform_indices = @transform_1, window_bounds = array<i64: 32, 32>}, {pipeline_mode = #tpu.pipeline_mode<synchronous>, transform_indices = @transform_2, window_bounds = array<i64: 32, 128>}, {pipeline_mode = #tpu.pipeline_mode<synchronous>, transform_indices = @transform_3, window_bounds = array<i64: 1, 128>}, {pipeline_mode = #tpu.pipeline_mode<synchronous>, transform_indices = @transform_4, window_bounds = array<i64: 32, 128>}, {pipeline_mode = #tpu.pipeline_mode<synchronous>, transform_indices = @transform_5, window_bounds = array<i64: 1, 128>}, {pipeline_mode = #tpu.pipeline_mode<synchronous>, transform_indices = @transform_6, window_bounds = array<i64: 64, 256>}, {pipeline_mode = #tpu.pipeline_mode<synchronous>, transform_indices = @transform_7, window_bounds = array<i64: 64, 128>}, {pipeline_mode = #tpu.pipeline_mode<synchronous>, transform_indices = @transform_8, window_bounds = array<i64: 1, 128>}, {pipeline_mode = #tpu.pipeline_mode<synchronous>, transform_indices = @transform_9, window_bounds = array<i64: 128, 128>}, {pipeline_mode = #tpu.pipeline_mode<synchronous>, transform_indices = @transform_10, window_bounds = array<i64: 1, 128>}, {pipeline_mode = #tpu.pipeline_mode<synchronous>, transform_indices = @transform_11, window_bounds = array<i64: 8, 128>}]} {
    %c0_i32 = arith.constant 0 : i32
    %0 = arith.cmpi eq, %arg0, %c0_i32 : i32
    %1 = arith.extui %0 : i1 to i32
    %c0_i32_0 = arith.constant 0 : i32
    %2 = arith.cmpi ne, %1, %c0_i32_0 : i32
    scf.if %2 {
      %cst_43 = arith.constant 0.000000e+00 : f32
      %121 = vector.broadcast %cst_43 : f32 to vector<8x64xf32>
      %c0_44 = arith.constant 0 : index
      %c0_45 = arith.constant 0 : index
      %122 = vector.load %arg13[%c0_44, %c0_45] : memref<8x64xf32, #tpu.memory_space<vmem>>, vector<8x64xf32>
      tpu.vector_store %arg13[%c0_44, %c0_45], %121 {strides = array<i32>} : memref<8x64xf32, #tpu.memory_space<vmem>>, vector<8x64xf32>,
      %cst_46 = arith.constant 0.000000e+00 : f32
      %123 = vector.broadcast %cst_46 : f32 to vector<8x64xf32>
      %c0_47 = arith.constant 0 : index
      %c0_48 = arith.constant 0 : index
      %124 = vector.load %arg14[%c0_47, %c0_48] : memref<8x64xf32, #tpu.memory_space<vmem>>, vector<8x64xf32>
      tpu.vector_store %arg14[%c0_47, %c0_48], %123 {strides = array<i32>} : memref<8x64xf32, #tpu.memory_space<vmem>>, vector<8x64xf32>,
    } else {
    }
    %c0 = arith.constant 0 : index
    %c0_1 = arith.constant 0 : index
    %3 = vector.load %arg1[%c0, %c0_1] : memref<32x32xbf16, #tpu.memory_space<vmem>>, vector<32x32xbf16>
    %c0_2 = arith.constant 0 : index
    %c0_3 = arith.constant 0 : index
    %4 = vector.load %arg3[%c0_2, %c0_3] : memref<32x128xbf16, #tpu.memory_space<vmem>>, vector<32x128xbf16>
    %cst = arith.constant dense<0.000000e+00> : vector<32x128xf32>
    %5 = tpu.matmul %3, %4, %cst {dimension_numbers = #tpu.dot_dimension_numbers<[1], [0], [0], [1], [0, 0, 1, 1], [], []>} : vector<32x32xbf16>, vector<32x128xbf16>, vector<32x128xf32> -> vector<32x128xf32>
    %c0_4 = arith.constant 0 : index
    %c0_5 = arith.constant 0 : index
    %6 = vector.load %arg4[%c0_4, %c0_5] : memref<1x128xf32, #tpu.memory_space<vmem>>, vector<1x128xf32>
    %7 = vector.broadcast %6 : vector<1x128xf32> to vector<32x128xf32>
    %8 = arith.addf %5, %7 : vector<32x128xf32>
    %c0_6 = arith.constant 0 : index
    %c0_7 = arith.constant 0 : index
    %9 = vector.load %arg2[%c0_6, %c0_7] : memref<32x32xbf16, #tpu.memory_space<vmem>>, vector<32x32xbf16>
    %c0_8 = arith.constant 0 : index
    %c0_9 = arith.constant 0 : index
    %10 = vector.load %arg5[%c0_8, %c0_9] : memref<32x128xbf16, #tpu.memory_space<vmem>>, vector<32x128xbf16>
    %cst_10 = arith.constant dense<0.000000e+00> : vector<32x128xf32>
    %11 = tpu.matmul %9, %10, %cst_10 {dimension_numbers = #tpu.dot_dimension_numbers<[1], [0], [0], [1], [0, 0, 1, 1], [], []>} : vector<32x32xbf16>, vector<32x128xbf16>, vector<32x128xf32> -> vector<32x128xf32>
    %c0_11 = arith.constant 0 : index
    %c0_12 = arith.constant 0 : index
    %12 = vector.load %arg6[%c0_11, %c0_12] : memref<1x128xf32, #tpu.memory_space<vmem>>, vector<1x128xf32>
    %13 = vector.broadcast %12 : vector<1x128xf32> to vector<32x128xf32>
    %14 = arith.addf %11, %13 : vector<32x128xf32>
    %15 = vector.extract_strided_slice %8 {offsets = [0, 0], sizes = [32, 32], strides = [1, 1]} : vector<32x128xf32> to vector<32x32xf32>
    %16 = vector.extract_strided_slice %14 {offsets = [0, 0], sizes = [32, 32], strides = [1, 1]} : vector<32x128xf32> to vector<32x32xf32>
    %17 = vector.extract_strided_slice %8 {offsets = [0, 32], sizes = [32, 32], strides = [1, 1]} : vector<32x128xf32> to vector<32x32xf32>
    %18 = vector.extract_strided_slice %14 {offsets = [0, 32], sizes = [32, 32], strides = [1, 1]} : vector<32x128xf32> to vector<32x32xf32>
    %19 = vector.extract_strided_slice %8 {offsets = [0, 64], sizes = [32, 32], strides = [1, 1]} : vector<32x128xf32> to vector<32x32xf32>
    %20 = vector.extract_strided_slice %14 {offsets = [0, 64], sizes = [32, 32], strides = [1, 1]} : vector<32x128xf32> to vector<32x32xf32>
    %21 = vector.extract_strided_slice %8 {offsets = [0, 96], sizes = [32, 32], strides = [1, 1]} : vector<32x128xf32> to vector<32x32xf32>
    %22 = vector.extract_strided_slice %14 {offsets = [0, 96], sizes = [32, 32], strides = [1, 1]} : vector<32x128xf32> to vector<32x32xf32>
    %23 = tpu.concatenate %15, %16, %17, %18, %19, %20, %21, %22 in 1 : vector<32x32xf32>, vector<32x32xf32>, vector<32x32xf32>, vector<32x32xf32>, vector<32x32xf32>, vector<32x32xf32>, vector<32x32xf32>, vector<32x32xf32> -> vector<32x256xf32>
    %c0_13 = arith.constant 0 : index
    %c0_14 = arith.constant 0 : index
    %24 = vector.load %arg15[%c0_13, %c0_14] : memref<32x256xf32, #tpu.memory_space<vmem>>, vector<32x256xf32>
    tpu.vector_store %arg15[%c0_13, %c0_14], %23 {strides = array<i32>} : memref<32x256xf32, #tpu.memory_space<vmem>>, vector<32x256xf32>,
    %c0_15 = arith.constant 0 : index
    %c0_16 = arith.constant 0 : index
    %25 = vector.load %arg7[%c0_15, %c0_16] : memref<64x256xf32, #tpu.memory_space<vmem>>, vector<64x256xf32>
    %c0_17 = arith.constant 0 : index
    %c0_18 = arith.constant 0 : index
    %26 = vector.load %arg13[%c0_17, %c0_18] : memref<8x64xf32, #tpu.memory_space<vmem>>, vector<8x64xf32>
    %c0_19 = arith.constant 0 : index
    %c0_20 = arith.constant 0 : index
    %27 = vector.load %arg14[%c0_19, %c0_20] : memref<8x64xf32, #tpu.memory_space<vmem>>, vector<8x64xf32>
    %c0_i32_21 = arith.constant 0 : i32
    %cst_22 = arith.constant dense<0.000000e+00> : vector<8x256xf32>
    %28 = tpu.matmul %26, %25, %cst_22 {dimension_numbers = #tpu.dot_dimension_numbers<[1], [0], [0], [1], [0, 0, 1, 1], [], []>} : vector<8x64xf32>, vector<64x256xf32>, vector<8x256xf32> -> vector<8x256xf32>
    %c8_i32 = arith.constant 8 : i32
    %29 = arith.muli %c0_i32_21, %c8_i32 : i32
    %30 = tpu.assume_multiple %29, 8 : i32
    %31 = arith.index_cast %30 : i32 to index
    %c0_23 = arith.constant 0 : index
    %32 = vector.load %arg15[%31, %c0_23] : memref<32x256xf32, #tpu.memory_space<vmem>>, vector<8x256xf32>
    %33 = arith.addf %32, %28 : vector<8x256xf32>
    %34 = vector.extract_strided_slice %33 {offsets = [0, 0], sizes = [8, 192], strides = [1, 1]} : vector<8x256xf32> to vector<8x192xf32>
    %35 = arith.negf %34 : vector<8x192xf32>
    %36 = math.exp %35 : vector<8x192xf32>
    %cst_24 = arith.constant 1.000000e+00 : f32
    %37 = vector.broadcast %cst_24 : f32 to vector<8x192xf32>
    %38 = arith.addf %37, %36 : vector<8x192xf32>
    %39 = arith.divf %37, %38 : vector<8x192xf32>
    %40 = vector.extract_strided_slice %33 {offsets = [0, 192], sizes = [8, 64], strides = [1, 1]} : vector<8x256xf32> to vector<8x64xf32>
    %41 = math.tanh %40 : vector<8x64xf32>
    %42 = vector.extract_strided_slice %39 {offsets = [0, 0], sizes = [8, 64], strides = [1, 1]} : vector<8x192xf32> to vector<8x64xf32>
    %43 = vector.extract_strided_slice %39 {offsets = [0, 64], sizes = [8, 64], strides = [1, 1]} : vector<8x192xf32> to vector<8x64xf32>
    %44 = vector.extract_strided_slice %39 {offsets = [0, 128], sizes = [8, 64], strides = [1, 1]} : vector<8x192xf32> to vector<8x64xf32>
    %45 = arith.mulf %43, %27 : vector<8x64xf32>
    %46 = arith.mulf %42, %41 : vector<8x64xf32>
    %47 = arith.addf %45, %46 : vector<8x64xf32>
    %48 = math.tanh %47 : vector<8x64xf32>
    %49 = arith.mulf %44, %48 : vector<8x64xf32>
    %c1_i32 = arith.constant 1 : i32
    %cst_25 = arith.constant dense<0.000000e+00> : vector<8x256xf32>
    %50 = tpu.matmul %49, %25, %cst_25 {dimension_numbers = #tpu.dot_dimension_numbers<[1], [0], [0], [1], [0, 0, 1, 1], [], []>} : vector<8x64xf32>, vector<64x256xf32>, vector<8x256xf32> -> vector<8x256xf32>
    %c8_i32_26 = arith.constant 8 : i32
    %51 = arith.muli %c1_i32, %c8_i32_26 : i32
    %52 = tpu.assume_multiple %51, 8 : i32
    %53 = arith.index_cast %52 : i32 to index
    %c0_27 = arith.constant 0 : index
    %54 = vector.load %arg15[%53, %c0_27] : memref<32x256xf32, #tpu.memory_space<vmem>>, vector<8x256xf32>
    %55 = arith.addf %54, %50 : vector<8x256xf32>
    %56 = vector.extract_strided_slice %55 {offsets = [0, 0], sizes = [8, 192], strides = [1, 1]} : vector<8x256xf32> to vector<8x192xf32>
    %57 = arith.negf %56 : vector<8x192xf32>
    %58 = math.exp %57 : vector<8x192xf32>
    %cst_28 = arith.constant 1.000000e+00 : f32
    %59 = vector.broadcast %cst_28 : f32 to vector<8x192xf32>
    %60 = arith.addf %59, %58 : vector<8x192xf32>
    %61 = arith.divf %59, %60 : vector<8x192xf32>
    %62 = vector.extract_strided_slice %55 {offsets = [0, 192], sizes = [8, 64], strides = [1, 1]} : vector<8x256xf32> to vector<8x64xf32>
    %63 = math.tanh %62 : vector<8x64xf32>
    %64 = vector.extract_strided_slice %61 {offsets = [0, 0], sizes = [8, 64], strides = [1, 1]} : vector<8x192xf32> to vector<8x64xf32>
    %65 = vector.extract_strided_slice %61 {offsets = [0, 64], sizes = [8, 64], strides = [1, 1]} : vector<8x192xf32> to vector<8x64xf32>
    %66 = vector.extract_strided_slice %61 {offsets = [0, 128], sizes = [8, 64], strides = [1, 1]} : vector<8x192xf32> to vector<8x64xf32>
    %67 = arith.mulf %65, %47 : vector<8x64xf32>
    %68 = arith.mulf %64, %63 : vector<8x64xf32>
    %69 = arith.addf %67, %68 : vector<8x64xf32>
    %70 = math.tanh %69 : vector<8x64xf32>
    %71 = arith.mulf %66, %70 : vector<8x64xf32>
    %c2_i32 = arith.constant 2 : i32
    %cst_29 = arith.constant dense<0.000000e+00> : vector<8x256xf32>
    %72 = tpu.matmul %71, %25, %cst_29 {dimension_numbers = #tpu.dot_dimension_numbers<[1], [0], [0], [1], [0, 0, 1, 1], [], []>} : vector<8x64xf32>, vector<64x256xf32>, vector<8x256xf32> -> vector<8x256xf32>
    %c8_i32_30 = arith.constant 8 : i32
    %73 = arith.muli %c2_i32, %c8_i32_30 : i32
    %74 = tpu.assume_multiple %73, 8 : i32
    %75 = arith.index_cast %74 : i32 to index
    %c0_31 = arith.constant 0 : index
    %76 = vector.load %arg15[%75, %c0_31] : memref<32x256xf32, #tpu.memory_space<vmem>>, vector<8x256xf32>
    %77 = arith.addf %76, %72 : vector<8x256xf32>
    %78 = vector.extract_strided_slice %77 {offsets = [0, 0], sizes = [8, 192], strides = [1, 1]} : vector<8x256xf32> to vector<8x192xf32>
    %79 = arith.negf %78 : vector<8x192xf32>
    %80 = math.exp %79 : vector<8x192xf32>
    %cst_32 = arith.constant 1.000000e+00 : f32
    %81 = vector.broadcast %cst_32 : f32 to vector<8x192xf32>
    %82 = arith.addf %81, %80 : vector<8x192xf32>
    %83 = arith.divf %81, %82 : vector<8x192xf32>
    %84 = vector.extract_strided_slice %77 {offsets = [0, 192], sizes = [8, 64], strides = [1, 1]} : vector<8x256xf32> to vector<8x64xf32>
    %85 = math.tanh %84 : vector<8x64xf32>
    %86 = vector.extract_strided_slice %83 {offsets = [0, 0], sizes = [8, 64], strides = [1, 1]} : vector<8x192xf32> to vector<8x64xf32>
    %87 = vector.extract_strided_slice %83 {offsets = [0, 64], sizes = [8, 64], strides = [1, 1]} : vector<8x192xf32> to vector<8x64xf32>
    %88 = vector.extract_strided_slice %83 {offsets = [0, 128], sizes = [8, 64], strides = [1, 1]} : vector<8x192xf32> to vector<8x64xf32>
    %89 = arith.mulf %87, %69 : vector<8x64xf32>
    %90 = arith.mulf %86, %85 : vector<8x64xf32>
    %91 = arith.addf %89, %90 : vector<8x64xf32>
    %92 = math.tanh %91 : vector<8x64xf32>
    %93 = arith.mulf %88, %92 : vector<8x64xf32>
    %c3_i32 = arith.constant 3 : i32
    %cst_33 = arith.constant dense<0.000000e+00> : vector<8x256xf32>
    %94 = tpu.matmul %93, %25, %cst_33 {dimension_numbers = #tpu.dot_dimension_numbers<[1], [0], [0], [1], [0, 0, 1, 1], [], []>} : vector<8x64xf32>, vector<64x256xf32>, vector<8x256xf32> -> vector<8x256xf32>
    %c8_i32_34 = arith.constant 8 : i32
    %95 = arith.muli %c3_i32, %c8_i32_34 : i32
    %96 = tpu.assume_multiple %95, 8 : i32
    %97 = arith.index_cast %96 : i32 to index
    %c0_35 = arith.constant 0 : index
    %98 = vector.load %arg15[%97, %c0_35] : memref<32x256xf32, #tpu.memory_space<vmem>>, vector<8x256xf32>
    %99 = arith.addf %98, %94 : vector<8x256xf32>
    %100 = vector.extract_strided_slice %99 {offsets = [0, 0], sizes = [8, 192], strides = [1, 1]} : vector<8x256xf32> to vector<8x192xf32>
    %101 = arith.negf %100 : vector<8x192xf32>
    %102 = math.exp %101 : vector<8x192xf32>
    %cst_36 = arith.constant 1.000000e+00 : f32
    %103 = vector.broadcast %cst_36 : f32 to vector<8x192xf32>
    %104 = arith.addf %103, %102 : vector<8x192xf32>
    %105 = arith.divf %103, %104 : vector<8x192xf32>
    %106 = vector.extract_strided_slice %99 {offsets = [0, 192], sizes = [8, 64], strides = [1, 1]} : vector<8x256xf32> to vector<8x64xf32>
    %107 = math.tanh %106 : vector<8x64xf32>
    %108 = vector.extract_strided_slice %105 {offsets = [0, 0], sizes = [8, 64], strides = [1, 1]} : vector<8x192xf32> to vector<8x64xf32>
    %109 = vector.extract_strided_slice %105 {offsets = [0, 64], sizes = [8, 64], strides = [1, 1]} : vector<8x192xf32> to vector<8x64xf32>
    %110 = vector.extract_strided_slice %105 {offsets = [0, 128], sizes = [8, 64], strides = [1, 1]} : vector<8x192xf32> to vector<8x64xf32>
    %111 = arith.mulf %109, %91 : vector<8x64xf32>
    %112 = arith.mulf %108, %107 : vector<8x64xf32>
    %113 = arith.addf %111, %112 : vector<8x64xf32>
    %114 = math.tanh %113 : vector<8x64xf32>
    %115 = arith.mulf %110, %114 : vector<8x64xf32>
    %c4_i32 = arith.constant 4 : i32
    %c0_37 = arith.constant 0 : index
    %c0_38 = arith.constant 0 : index
    %116 = vector.load %arg13[%c0_37, %c0_38] : memref<8x64xf32, #tpu.memory_space<vmem>>, vector<8x64xf32>
    tpu.vector_store %arg13[%c0_37, %c0_38], %115 {strides = array<i32>} : memref<8x64xf32, #tpu.memory_space<vmem>>, vector<8x64xf32>,
    %c0_39 = arith.constant 0 : index
    %c0_40 = arith.constant 0 : index
    %117 = vector.load %arg14[%c0_39, %c0_40] : memref<8x64xf32, #tpu.memory_space<vmem>>, vector<8x64xf32>
    tpu.vector_store %arg14[%c0_39, %c0_40], %113 {strides = array<i32>} : memref<8x64xf32, #tpu.memory_space<vmem>>, vector<8x64xf32>,
    %c1_i32_41 = arith.constant 1 : i32
    %118 = arith.cmpi eq, %arg0, %c1_i32_41 : i32
    %119 = arith.extui %118 : i1 to i32
    %c0_i32_42 = arith.constant 0 : i32
    %120 = arith.cmpi ne, %119, %c0_i32_42 : i32
    scf.if %120 {
      %c0_43 = arith.constant 0 : index
      %c0_44 = arith.constant 0 : index
      %121 = vector.load %arg8[%c0_43, %c0_44] : memref<64x128xf32, #tpu.memory_space<vmem>>, vector<64x128xf32>
      %cst_45 = arith.constant dense<0.000000e+00> : vector<8x128xf32>
      %122 = tpu.matmul %115, %121, %cst_45 {dimension_numbers = #tpu.dot_dimension_numbers<[1], [0], [0], [1], [0, 0, 1, 1], [], []>} : vector<8x64xf32>, vector<64x128xf32>, vector<8x128xf32> -> vector<8x128xf32>
      %c0_46 = arith.constant 0 : index
      %c0_47 = arith.constant 0 : index
      %123 = vector.load %arg9[%c0_46, %c0_47] : memref<1x128xf32, #tpu.memory_space<vmem>>, vector<1x128xf32>
      %124 = vector.broadcast %123 : vector<1x128xf32> to vector<8x128xf32>
      %125 = arith.addf %122, %124 : vector<8x128xf32>
      %cst_48 = arith.constant 0.000000e+00 : f32
      %126 = vector.broadcast %cst_48 : f32 to vector<8x128xf32>
      %127 = arith.maximumf %125, %126 : vector<8x128xf32>
      %c0_49 = arith.constant 0 : index
      %c0_50 = arith.constant 0 : index
      %128 = vector.load %arg10[%c0_49, %c0_50] : memref<128x128xf32, #tpu.memory_space<vmem>>, vector<128x128xf32>
      %cst_51 = arith.constant dense<0.000000e+00> : vector<8x128xf32>
      %129 = tpu.matmul %127, %128, %cst_51 {dimension_numbers = #tpu.dot_dimension_numbers<[1], [0], [0], [1], [0, 0, 1, 1], [], []>} : vector<8x128xf32>, vector<128x128xf32>, vector<8x128xf32> -> vector<8x128xf32>
      %c0_52 = arith.constant 0 : index
      %c0_53 = arith.constant 0 : index
      %130 = vector.load %arg11[%c0_52, %c0_53] : memref<1x128xf32, #tpu.memory_space<vmem>>, vector<1x128xf32>
      %131 = vector.broadcast %130 : vector<1x128xf32> to vector<8x128xf32>
      %132 = arith.addf %129, %131 : vector<8x128xf32>
      %c0_54 = arith.constant 0 : index
      %c0_55 = arith.constant 0 : index
      %133 = vector.load %arg12[%c0_54, %c0_55] : memref<8x128xf32, #tpu.memory_space<vmem>>, vector<8x128xf32>
      tpu.vector_store %arg12[%c0_54, %c0_55], %132 {strides = array<i32>} : memref<8x128xf32, #tpu.memory_space<vmem>>, vector<8x128xf32>,
    } else {
    }
    return
  }
  func.func @transform_0(%arg0: i32) -> (i32, i32) {
    %c0_i32 = arith.constant 0 : i32
    %c0_i32_0 = arith.constant 0 : i32
    return %arg0, %c0_i32 : i32, i32
  }
  func.func @transform_1(%arg0: i32) -> (i32, i32) {
    %c0_i32 = arith.constant 0 : i32
    %c0_i32_0 = arith.constant 0 : i32
    return %arg0, %c0_i32 : i32, i32
  }
  func.func @transform_2(%arg0: i32) -> (i32, i32) {
    %c0_i32 = arith.constant 0 : i32
    %c0_i32_0 = arith.constant 0 : i32
    %c0_i32_1 = arith.constant 0 : i32
    return %c0_i32, %c0_i32_0 : i32, i32
  }
  func.func @transform_3(%arg0: i32) -> (i32, i32) {
    %c0_i32 = arith.constant 0 : i32
    %c0_i32_0 = arith.constant 0 : i32
    %c0_i32_1 = arith.constant 0 : i32
    return %c0_i32, %c0_i32_0 : i32, i32
  }
  func.func @transform_4(%arg0: i32) -> (i32, i32) {
    %c0_i32 = arith.constant 0 : i32
    %c0_i32_0 = arith.constant 0 : i32
    %c0_i32_1 = arith.constant 0 : i32
    return %c0_i32, %c0_i32_0 : i32, i32
  }
  func.func @transform_5(%arg0: i32) -> (i32, i32) {
    %c0_i32 = arith.constant 0 : i32
    %c0_i32_0 = arith.constant 0 : i32
    %c0_i32_1 = arith.constant 0 : i32
    return %c0_i32, %c0_i32_0 : i32, i32
  }
  func.func @transform_6(%arg0: i32) -> (i32, i32) {
    %c0_i32 = arith.constant 0 : i32
    %c0_i32_0 = arith.constant 0 : i32
    %c0_i32_1 = arith.constant 0 : i32
    return %c0_i32, %c0_i32_0 : i32, i32
  }
  func.func @transform_7(%arg0: i32) -> (i32, i32) {
    %c0_i32 = arith.constant 0 : i32
    %c0_i32_0 = arith.constant 0 : i32
    %c0_i32_1 = arith.constant 0 : i32
    return %c0_i32, %c0_i32_0 : i32, i32
  }
  func.func @transform_8(%arg0: i32) -> (i32, i32) {
    %c0_i32 = arith.constant 0 : i32
    %c0_i32_0 = arith.constant 0 : i32
    %c0_i32_1 = arith.constant 0 : i32
    return %c0_i32, %c0_i32_0 : i32, i32
  }
  func.func @transform_9(%arg0: i32) -> (i32, i32) {
    %c0_i32 = arith.constant 0 : i32
    %c0_i32_0 = arith.constant 0 : i32
    %c0_i32_1 = arith.constant 0 : i32
    return %c0_i32, %c0_i32_0 : i32, i32
  }
  func.func @transform_10(%arg0: i32) -> (i32, i32) {
    %c0_i32 = arith.constant 0 : i32
    %c0_i32_0 = arith.constant 0 : i32
    %c0_i32_1 = arith.constant 0 : i32
    return %c0_i32, %c0_i32_0 : i32, i32
  }
  func.func @transform_11(%arg0: i32) -> (i32, i32) {
    %c0_i32 = arith.constant 0 : i32
    %c0_i32_0 = arith.constant 0 : i32
    %c0_i32_1 = arith.constant 0 : i32
    return %c0_i32, %c0_i32_0 : i32, i32
  }
}

</mosaic_0001>

<llo_original>
// kernel: tpu_custom_call.1
$region0: #{tpu_custom_call.1}
  #allocation0 [shape = 'u32[]', space=smem, size = 0x4, offset = 0x4, fixed_abs, tag = 'smem constant byte address 0x4 - core index']
  #allocation1 [shape = 'u32[144,128]{1,0:T(1,128)}', space=vmem, size = 0x12000, scoped, tag = 'internal scratch']
  #allocation2 [shape = 'f32[8,64]{1,0:T(8,128)}', space=vmem, size = 0x1000, scoped, tag = 'scratch operand']
  #allocation3 [shape = 'f32[8,64]{1,0:T(8,128)}', space=vmem, size = 0x1000, scoped, tag = 'scratch operand']
  #allocation4 [shape = 'f32[32,256]{1,0:T(8,128)}', space=vmem, size = 0x8000, scoped, tag = 'scratch operand']
  %s0 = inlined_call_operand.vmem [shape: bf16[64,32], index: 0, kind: input, shape index: {}]
  %s1 = inlined_call_operand.vmem [shape: bf16[64,32], index: 1, kind: input, shape index: {}]
  %s2 = inlined_call_operand.hbm [shape: bf16[32,128], index: 2, kind: input, shape index: {}]
  %s3 = inlined_call_operand.vmem [shape: f32[1,128], index: 3, kind: input, shape index: {}]
  %s4 = inlined_call_operand.hbm [shape: bf16[32,128], index: 4, kind: input, shape index: {}]
  %s5 = inlined_call_operand.vmem [shape: f32[1,128], index: 5, kind: input, shape index: {}]
  %s6 = inlined_call_operand.hbm [shape: f32[64,256], index: 6, kind: input, shape index: {}]
  %s7 = inlined_call_operand.hbm [shape: f32[64,128], index: 7, kind: input, shape index: {}]
  %s8 = inlined_call_operand.hbm [shape: f32[1,128], index: 8, kind: input, shape index: {}]
  %s9 = inlined_call_operand.vmem [shape: f32[128,128], index: 9, kind: input, shape index: {}]
  %s10 = inlined_call_operand.vmem [shape: f32[1,128], index: 10, kind: input, shape index: {}]
  %s11 = inlined_call_operand.hbm [shape: f32[8,128], index: 11, kind: output, shape index: {}]
  %s12 = sld [smem:[#allocation0]]
  $region105: #{tpu_custom_call.1} parent=0
    _
  %s14 = ssub.s32 1, %s12
  %s15 = scalar_select 0, %s14, %s12
  $region1: #{tpu_custom_call.1} parent=0
    #allocation5 [shape = 'u8[8192]{0}', space=vmem, size = 0x2000, scoped, tag = 'input window, operand 2, single buffered']
    #allocation6 [shape = 's32[2]{0}', space=sflag, size = 0x8, scoped, tag = 'scoped memory for tpu_custom_call.1']
    #allocation7 [shape = 's32[2]{0}', space=sflag, size = 0x8, scoped, tag = 'scoped memory for tpu_custom_call.1']
    #allocation8 [shape = 'u8[8192]{0}', space=vmem, size = 0x2000, scoped, tag = 'input window, operand 4, single buffered']
    #allocation9 [shape = 's32[1]{0}', space=sflag, size = 0x4, scoped, tag = 'scoped memory for tpu_custom_call.1']
    #allocation10 [shape = 'u8[65536]{0}', space=vmem, size = 0x10000, scoped, tag = 'input window, operand 6, single buffered']
    #allocation11 [shape = 'u8[32768]{0}', space=vmem, size = 0x8000, scoped, tag = 'input window, operand 7, single buffered']
    #allocation12 [shape = 's32[1]{0}', space=sflag, size = 0x4, scoped, tag = 'scoped memory for tpu_custom_call.1']
    #allocation13 [shape = 'u8[512]{0}', space=vmem, size = 0x400, scoped, tag = 'input window, operand 8, single buffered']
    #allocation14 [shape = 'u8[4096]{0}', space=vmem, size = 0x1000, scoped, tag = 'output window, operand 0, single buffered']
    %16 = vsyncpa [#allocation6], 0
    %17 = vsyncpa [#allocation9], 0
    %18 = vsyncpa [#allocation12], 0
    %19 = vsyncpa [#allocation7], 0
    loop: start=0, step=1, limit=4
    $region2: #{tpu_custom_call.1} parent=1 // loop_pre_header
      _
    $region3: #{tpu_custom_call.1} parent=1 // loop_header
      %s21 = sphi 0, %s25
      %p22 = scmp.ge.s32.totalorder %s21, 4
      %s31 = sphi 0, %s33
      %s34 = sphi 0, %s31
      %s35 = sphi 0, %s34
      %s51 = sphi 0, %s35
      %s57 = sphi 0, %s59
      %s60 = sphi 0, %s57
      %s61 = sphi 0, %s60
      %s77 = sphi 0, %s61
      %s81 = sphi 0, %s81
      %s83 = sphi 0, %s81
      %s84 = sphi 0, %s83
      %s98 = sphi 0, %s84
      %s102 = sphi 0, %s102
      %s104 = sphi 0, %s102
      %s105 = sphi 0, %s104
      %s119 = sphi 0, %s105
      %s123 = sphi 0, %s123
      %s125 = sphi 0, %s123
      %s126 = sphi 0, %s125
      %s140 = sphi 0, %s126
      %s144 = sphi 0, %s144
      %s146 = sphi 0, %s144
      %s147 = sphi 0, %s146
      %s161 = sphi 0, %s147
      %s165 = sphi 0, %s165
      %s167 = sphi 0, %s165
      %s168 = sphi 0, %s167
      %s182 = sphi 0, %s168
      %s186 = sphi 0, %s186
      %s188 = sphi 0, %s186
      %s189 = sphi 0, %s188
      %s203 = sphi 0, %s189
      %s207 = sphi 0, %s207
      %s209 = sphi 0, %s207
      %s210 = sphi 0, %s209
      %s224 = sphi 0, %s210
      %s228 = sphi 0, %s228
      %s230 = sphi 0, %s228
      %s231 = sphi 0, %s230
      %s245 = sphi 0, %s231
      %s249 = sphi 0, %s249
      %s251 = sphi 0, %s249
      %s252 = sphi 0, %s251
      %s266 = sphi 0, %s252
      %s270 = sphi 0, %s270
      %s272 = sphi 0, %s270
      %s273 = sphi 0, %s272
      %s287 = sphi 0, %s273
    $region4: #{tpu_custom_call.1} parent=1 // loop_header_branch
      %24 = sbr.rel (%p22) target = $region8
    $region5: #{tpu_custom_call.1} parent=1 // loop_body
      %s26 = ssub.s32 %s21, 1
      %s27 = ssub.s32 %s21, 2
      %s28 = sadd.s32 %s21, 1
      %s29 = ssub.s32 %s21, %s28
      %p30 = scmp.eq.s32.totalorder %s29, 0
      %s32 = sadd.s32 %s31, 1
      %s33 = scalar_select %p30, %s31, %s32
      %p36 = pneg %p30
      %p37 = scmp.eq.s32.totalorder %s21, 1
      %p38 = por %p36, %p37
      %p39 = scmp.ne.s32.totalorder %s31, %s34
      %p40 = scmp.eq.s32.totalorder %s21, 0
      %p41 = por %p39, %p40
      %p42 = scmp.ne.s32.totalorder %s31, %s34
      %p43 = scmp.eq.s32.totalorder %s26, 1
      %p44 = por %p42, %p43
      %p45 = scmp.ne.s32.totalorder %s34, %s35
      %p46 = scmp.eq.s32.totalorder %s26, 0
      %p47 = por %p45, %p46
      %p48 = scmp.ne.s32.totalorder %s34, %s35
      %p49 = scmp.eq.s32.totalorder %s27, 1
      %p50 = por %p48, %p49
      %p52 = scmp.ne.s32.totalorder %s35, %s51
      %p53 = scmp.eq.s32.totalorder %s27, 0
      %p54 = por %p52, %p53
      %s55 = ssub.s32 %s21, %s28
      %p56 = scmp.eq.s32.totalorder %s55, 0
      %s58 = sadd.s32 %s57, 1
      %s59 = scalar_select %p56, %s57, %s58
      %p62 = pneg %p56
      %p63 = scmp.eq.s32.totalorder %s21, 1
      %p64 = por %p62, %p63
      %p65 = scmp.ne.s32.totalorder %s57, %s60
      %p66 = scmp.eq.s32.totalorder %s21, 0
      %p67 = por %p65, %p66
      %p68 = scmp.ne.s32.totalorder %s57, %s60
      %p69 = scmp.eq.s32.totalorder %s26, 1
      %p70 = por %p68, %p69
      %p71 = scmp.ne.s32.totalorder %s60, %s61
      %p72 = scmp.eq.s32.totalorder %s26, 0
      %p73 = por %p71, %p72
      %p74 = scmp.ne.s32.totalorder %s60, %s61
      %p75 = scmp.eq.s32.totalorder %s27, 1
      %p76 = por %p74, %p75
      %p78 = scmp.ne.s32.totalorder %s61, %s77
      %p79 = scmp.eq.s32.totalorder %s27, 0
      %p80 = por %p78, %p79
      %s82 = sadd.s32 %s81, 1
      %p85 = scmp.eq.s32.totalorder %s21, 1
      %p86 = scmp.ne.s32.totalorder %s81, %s83
      %p87 = scmp.eq.s32.totalorder %s21, 0
      %p88 = por %p86, %p87
      %p89 = scmp.ne.s32.totalorder %s81, %s83
      %p90 = scmp.eq.s32.totalorder %s26, 1
      %p91 = por %p89, %p90
      %p92 = scmp.ne.s32.totalorder %s83, %s84
      %p93 = scmp.eq.s32.totalorder %s26, 0
      %p94 = por %p92, %p93
      %p95 = scmp.ne.s32.totalorder %s83, %s84
      %p96 = scmp.eq.s32.totalorder %s27, 1
      %p97 = por %p95, %p96
      %p99 = scmp.ne.s32.totalorder %s84, %s98
      %p100 = scmp.eq.s32.totalorder %s27, 0
      %p101 = por %p99, %p100
      %s103 = sadd.s32 %s102, 1
      %p106 = scmp.eq.s32.totalorder %s21, 1
      %p107 = scmp.ne.s32.totalorder %s102, %s104
      %p108 = scmp.eq.s32.totalorder %s21, 0
      %p109 = por %p107, %p108
      %p110 = scmp.ne.s32.totalorder %s102, %s104
      %p111 = scmp.eq.s32.totalorder %s26, 1
      %p112 = por %p110, %p111
      %p113 = scmp.ne.s32.totalorder %s104, %s105
      %p114 = scmp.eq.s32.totalorder %s26, 0
      %p115 = por %p113, %p114
      %p116 = scmp.ne.s32.totalorder %s104, %s105
      %p117 = scmp.eq.s32.totalorder %s27, 1
      %p118 = por %p116, %p117
      %p120 = scmp.ne.s32.totalorder %s105, %s119
      %p121 = scmp.eq.s32.totalorder %s27, 0
      %p122 = por %p120, %p121
      %s124 = sadd.s32 %s123, 1
      %p127 = scmp.eq.s32.totalorder %s21, 1
      %p128 = scmp.ne.s32.totalorder %s123, %s125
      %p129 = scmp.eq.s32.totalorder %s21, 0
      %p130 = por %p128, %p129
      %p131 = scmp.ne.s32.totalorder %s123, %s125
      %p132 = scmp.eq.s32.totalorder %s26, 1
      %p133 = por %p131, %p132
      %p134 = scmp.ne.s32.totalorder %s125, %s126
      %p135 = scmp.eq.s32.totalorder %s26, 0
      %p136 = por %p134, %p135
      %p137 = scmp.ne.s32.totalorder %s125, %s126
      %p138 = scmp.eq.s32.totalorder %s27, 1
      %p139 = por %p137, %p138
      %p141 = scmp.ne.s32.totalorder %s126, %s140
      %p142 = scmp.eq.s32.totalorder %s27, 0
      %p143 = por %p141, %p142
      %s145 = sadd.s32 %s144, 1
      %p148 = scmp.eq.s32.totalorder %s21, 1
      %p149 = scmp.ne.s32.totalorder %s144, %s146
      %p150 = scmp.eq.s32.totalorder %s21, 0
      %p151 = por %p149, %p150
      %p152 = scmp.ne.s32.totalorder %s144, %s146
      %p153 = scmp.eq.s32.totalorder %s26, 1
      %p154 = por %p152, %p153
      %p155 = scmp.ne.s32.totalorder %s146, %s147
      %p156 = scmp.eq.s32.totalorder %s26, 0
      %p157 = por %p155, %p156
      %p158 = scmp.ne.s32.totalorder %s146, %s147
      %p159 = scmp.eq.s32.totalorder %s27, 1
      %p160 = por %p158, %p159
      %p162 = scmp.ne.s32.totalorder %s147, %s161
      %p163 = scmp.eq.s32.totalorder %s27, 0
      %p164 = por %p162, %p163
      %s166 = sadd.s32 %s165, 1
      %p169 = scmp.eq.s32.totalorder %s21, 1
      %p170 = scmp.ne.s32.totalorder %s165, %s167
      %p171 = scmp.eq.s32.totalorder %s21, 0
      %p172 = por %p170, %p171
      %p173 = scmp.ne.s32.totalorder %s165, %s167
      %p174 = scmp.eq.s32.totalorder %s26, 1
      %p175 = por %p173, %p174
      %p176 = scmp.ne.s32.totalorder %s167, %s168
      %p177 = scmp.eq.s32.totalorder %s26, 0
      %p178 = por %p176, %p177
      %p179 = scmp.ne.s32.totalorder %s167, %s168
      %p180 = scmp.eq.s32.totalorder %s27, 1
      %p181 = por %p179, %p180
      %p183 = scmp.ne.s32.totalorder %s168, %s182
      %p184 = scmp.eq.s32.totalorder %s27, 0
      %p185 = por %p183, %p184
      %s187 = sadd.s32 %s186, 1
      %p190 = scmp.eq.s32.totalorder %s21, 1
      %p191 = scmp.ne.s32.totalorder %s186, %s188
      %p192 = scmp.eq.s32.totalorder %s21, 0
      %p193 = por %p191, %p192
      %p194 = scmp.ne.s32.totalorder %s186, %s188
      %p195 = scmp.eq.s32.totalorder %s26, 1
      %p196 = por %p194, %p195
      %p197 = scmp.ne.s32.totalorder %s188, %s189
      %p198 = scmp.eq.s32.totalorder %s26, 0
      %p199 = por %p197, %p198
      %p200 = scmp.ne.s32.totalorder %s188, %s189
      %p201 = scmp.eq.s32.totalorder %s27, 1
      %p202 = por %p200, %p201
      %p204 = scmp.ne.s32.totalorder %s189, %s203
      %p205 = scmp.eq.s32.totalorder %s27, 0
      %p206 = por %p204, %p205
      %s208 = sadd.s32 %s207, 1
      %p211 = scmp.eq.s32.totalorder %s21, 1
      %p212 = scmp.ne.s32.totalorder %s207, %s209
      %p213 = scmp.eq.s32.totalorder %s21, 0
      %p214 = por %p212, %p213
      %p215 = scmp.ne.s32.totalorder %s207, %s209
      %p216 = scmp.eq.s32.totalorder %s26, 1
      %p217 = por %p215, %p216
      %p218 = scmp.ne.s32.totalorder %s209, %s210
      %p219 = scmp.eq.s32.totalorder %s26, 0
      %p220 = por %p218, %p219
      %p221 = scmp.ne.s32.totalorder %s209, %s210
      %p222 = scmp.eq.s32.totalorder %s27, 1
      %p223 = por %p221, %p222
      %p225 = scmp.ne.s32.totalorder %s210, %s224
      %p226 = scmp.eq.s32.totalorder %s27, 0
      %p227 = por %p225, %p226
      %s229 = sadd.s32 %s228, 1
      %p232 = scmp.eq.s32.totalorder %s21, 1
      %p233 = scmp.ne.s32.totalorder %s228, %s230
      %p234 = scmp.eq.s32.totalorder %s21, 0
      %p235 = por %p233, %p234
      %p236 = scmp.ne.s32.totalorder %s228, %s230
      %p237 = scmp.eq.s32.totalorder %s26, 1
      %p238 = por %p236, %p237
      %p239 = scmp.ne.s32.totalorder %s230, %s231
      %p240 = scmp.eq.s32.totalorder %s26, 0
      %p241 = por %p239, %p240
      %p242 = scmp.ne.s32.totalorder %s230, %s231
      %p243 = scmp.eq.s32.totalorder %s27, 1
      %p244 = por %p242, %p243
      %p246 = scmp.ne.s32.totalorder %s231, %s245
      %p247 = scmp.eq.s32.totalorder %s27, 0
      %p248 = por %p246, %p247
      %s250 = sadd.s32 %s249, 1
      %p253 = scmp.eq.s32.totalorder %s21, 1
      %p254 = scmp.ne.s32.totalorder %s249, %s251
      %p255 = scmp.eq.s32.totalorder %s21, 0
      %p256 = por %p254, %p255
      %p257 = scmp.ne.s32.totalorder %s249, %s251
      %p258 = scmp.eq.s32.totalorder %s26, 1
      %p259 = por %p257, %p258
      %p260 = scmp.ne.s32.totalorder %s251, %s252
      %p261 = scmp.eq.s32.totalorder %s26, 0
      %p262 = por %p260, %p261
      %p263 = scmp.ne.s32.totalorder %s251, %s252
      %p264 = scmp.eq.s32.totalorder %s27, 1
      %p265 = por %p263, %p264
      %p267 = scmp.ne.s32.totalorder %s252, %s266
      %p268 = scmp.eq.s32.totalorder %s27, 0
      %p269 = por %p267, %p268
      %s271 = sadd.s32 %s270, 1
      %p274 = scmp.eq.s32.totalorder %s21, 1
      %p275 = scmp.ne.s32.totalorder %s270, %s272
      %p276 = scmp.eq.s32.totalorder %s21, 0
      %p277 = por %p275, %p276
      %p278 = scmp.ne.s32.totalorder %s270, %s272
      %p279 = scmp.eq.s32.totalorder %s26, 1
      %p280 = por %p278, %p279
      %p281 = scmp.ne.s32.totalorder %s272, %s273
      %p282 = scmp.eq.s32.totalorder %s26, 0
      %p283 = por %p281, %p282
      %p284 = scmp.ne.s32.totalorder %s272, %s273
      %p285 = scmp.eq.s32.totalorder %s27, 1
      %p286 = por %p284, %p285
      %p288 = scmp.ne.s32.totalorder %s273, %s287
      %p289 = scmp.eq.s32.totalorder %s27, 0
      %p290 = por %p288, %p289
      %p291 = scmp.le.s32.totalorder 1, %s21
      %p292 = scmp.lt.s32.totalorder %s21, 3
      %p293 = pnand %p291, %p292
      %p294 = pneg %p293
      // Predicated region
      $region9: #{tpu_custom_call.1} parent=5 // pred_check
        _
      $region10: #{tpu_custom_call.1} parent=5 // pred_check_branch
        %296 = sbr.rel (%p293) target = $region12
      $region11: #{tpu_custom_call.1} parent=5 // pred_region
        %s297 = ssub.s32 %s21, 1
        // Predicated region
        $region13: #{tpu_custom_call.1} parent=11 // pred_check
          %p298 = pneg %p94
        $region14: #{tpu_custom_call.1} parent=11 // pred_check_branch
          %300 = sbr.rel (%p298) target = $region16
        $region15: #{tpu_custom_call.1} parent=11 // pred_region
          %s302 = ssub.s32 256, 256
          %303 = vsyncadd [#allocation6], %s302
          %s304 = sshll.u32 [#allocation5], 4
          %s305 = int_to_ptr.vmem [resolvable:$true] %s304
          %310 = dma.hbm_to_vmem [thread:$0]  %s2, 256, %s305, [#allocation6], 64, 64, 4
        $region16: #{tpu_custom_call.1} parent=11 // pred_fallthru
          _
        // Predicated region
        $region17: #{tpu_custom_call.1} parent=11 // pred_check
          %p311 = pneg %p115
        $region18: #{tpu_custom_call.1} parent=11 // pred_check_branch
          %313 = sbr.rel (%p311) target = $region20
        $region19: #{tpu_custom_call.1} parent=11 // pred_region
          _
        $region20: #{tpu_custom_call.1} parent=11 // pred_fallthru
          _
        // Predicated region
        $region21: #{tpu_custom_call.1} parent=11 // pred_check
          %p314 = pneg %p136
        $region22: #{tpu_custom_call.1} parent=11 // pred_check_branch
          %316 = sbr.rel (%p314) target = $region24
        $region23: #{tpu_custom_call.1} parent=11 // pred_region
          %s318 = ssub.s32 256, 256
          %319 = vsyncadd [#allocation9], %s318
          %s320 = sshll.u32 [#allocation8], 4
          %s321 = int_to_ptr.vmem [resolvable:$true] %s320
          %326 = dma.hbm_to_vmem [thread:$0]  %s4, 256, %s321, [#allocation9], 64, 64, 4
        $region24: #{tpu_custom_call.1} parent=11 // pred_fallthru
          _
        // Predicated region
        $region25: #{tpu_custom_call.1} parent=11 // pred_check
          %p327 = pneg %p157
        $region26: #{tpu_custom_call.1} parent=11 // pred_check_branch
          %329 = sbr.rel (%p327) target = $region28
        $region27: #{tpu_custom_call.1} parent=11 // pred_region
          _
        $region28: #{tpu_custom_call.1} parent=11 // pred_fallthru
          _
        // Predicated region
        $region29: #{tpu_custom_call.1} parent=11 // pred_check
          %p330 = pneg %p178
        $region30: #{tpu_custom_call.1} parent=11 // pred_check_branch
          %332 = sbr.rel (%p330) target = $region32
        $region31: #{tpu_custom_call.1} parent=11 // pred_region
          %s334 = ssub.s32 2048, 2048
          %335 = vsyncadd [#allocation9], %s334
          %s336 = sshll.u32 [#allocation10], 4
          %s337 = int_to_ptr.vmem [resolvable:$true] %s336
          %342 = dma.hbm_to_vmem [thread:$0]  %s6, 2048, %s337, [#allocation9], 256, 256, 16
        $region32: #{tpu_custom_call.1} parent=11 // pred_fallthru
          _
        // Predicated region
        $region33: #{tpu_custom_call.1} parent=11 // pred_check
          %p343 = pneg %p199
        $region34: #{tpu_custom_call.1} parent=11 // pred_check_branch
          %345 = sbr.rel (%p343) target = $region36
        $region35: #{tpu_custom_call.1} parent=11 // pred_region
          %s347 = ssub.s32 1024, 1024
          %348 = vsyncadd [#allocation12], %s347
          %s349 = sshll.u32 [#allocation11], 4
          %s350 = int_to_ptr.vmem [resolvable:$true] %s349
          %355 = dma.hbm_to_vmem [thread:$0]  %s7, 1024, %s350, [#allocation12], 128, 128, 8
        $region36: #{tpu_custom_call.1} parent=11 // pred_fallthru
          _
        // Predicated region
        $region37: #{tpu_custom_call.1} parent=11 // pred_check
          %p356 = pneg %p220
        $region38: #{tpu_custom_call.1} parent=11 // pred_check_branch
          %358 = sbr.rel (%p356) target = $region40
        $region39: #{tpu_custom_call.1} parent=11 // pred_region
          %s360 = ssub.s32 16, 16
          %361 = vsyncadd [#allocation12], %s360
          %s363 = sshll.u32 [#allocation13], 4
          %s364 = int_to_ptr.vmem [resolvable:$true] %s363
          %366 = dma.hbm_to_vmem [thread:$0]  %s8, 16, %s364, [#allocation12]
        $region40: #{tpu_custom_call.1} parent=11 // pred_fallthru
          _
        // Predicated region
        $region41: #{tpu_custom_call.1} parent=11 // pred_check
          %p367 = pneg %p241
        $region42: #{tpu_custom_call.1} parent=11 // pred_check_branch
          %369 = sbr.rel (%p367) target = $region44
        $region43: #{tpu_custom_call.1} parent=11 // pred_region
          _
        $region44: #{tpu_custom_call.1} parent=11 // pred_fallthru
          _
        // Predicated region
        $region45: #{tpu_custom_call.1} parent=11 // pred_check
          %p370 = pneg %p262
        $region46: #{tpu_custom_call.1} parent=11 // pred_check_branch
          %372 = sbr.rel (%p370) target = $region48
        $region47: #{tpu_custom_call.1} parent=11 // pred_region
          _
        $region48: #{tpu_custom_call.1} parent=11 // pred_fallthru
          _
      $region12: #{tpu_custom_call.1} parent=5 // pred_fallthru
        _
      %p373 = scmp.lt.s32.totalorder %s21, 2
      // Predicated region
      $region49: #{tpu_custom_call.1} parent=5 // pred_check
        %p374 = pneg %p373
      $region50: #{tpu_custom_call.1} parent=5 // pred_check_branch
        %376 = sbr.rel (%p374) target = $region52
      $region51: #{tpu_custom_call.1} parent=5 // pred_region
        // Predicated region
        $region53: #{tpu_custom_call.1} parent=51 // pred_check
          %p377 = pneg %p41
        $region54: #{tpu_custom_call.1} parent=51 // pred_check_branch
          %379 = sbr.rel (%p377) target = $region56
        $region55: #{tpu_custom_call.1} parent=51 // pred_region
          %s380 = smul.u32 4, %s21
          %p381 = scmp.lt.s32.totalorder %s380, 7
          %s382 = scalar_select %p381, %s380, 7
          %s383 = smul.addr %s382, 4
          %s384 = scalar_lea.vmem %s0, %s383
          %s385 = smul.u32 4, %s21
        $region56: #{tpu_custom_call.1} parent=51 // pred_fallthru
          _
        // Predicated region
        $region57: #{tpu_custom_call.1} parent=51 // pred_check
          %p386 = pneg %p67
        $region58: #{tpu_custom_call.1} parent=51 // pred_check_branch
          %388 = sbr.rel (%p386) target = $region60
        $region59: #{tpu_custom_call.1} parent=51 // pred_region
          %s389 = smul.u32 4, %s21
          %p390 = scmp.lt.s32.totalorder %s389, 7
          %s391 = scalar_select %p390, %s389, 7
          %s392 = smul.addr %s391, 4
          %s393 = scalar_lea.vmem %s1, %s392
          %s394 = smul.u32 4, %s21
        $region60: #{tpu_custom_call.1} parent=51 // pred_fallthru
          _
      $region52: #{tpu_custom_call.1} parent=5 // pred_fallthru
        _
      %p395 = scmp.le.s32.totalorder 1, %s21
      %p396 = scmp.lt.s32.totalorder %s21, 3
      %p397 = pnand %p395, %p396
      %p398 = pneg %p397
      // Predicated region
      $region61: #{tpu_custom_call.1} parent=5 // pred_check
        _
      $region62: #{tpu_custom_call.1} parent=5 // pred_check_branch
        %400 = sbr.rel (%p397) target = $region64
      $region63: #{tpu_custom_call.1} parent=5 // pred_region
        %s401 = ssub.s32 %s21, 1
        // Predicated region
        $region65: #{tpu_custom_call.1} parent=63 // pred_check
          %p402 = pneg %p94
        $region66: #{tpu_custom_call.1} parent=63 // pred_check_branch
          %404 = sbr.rel (%p402) target = $region68
        $region67: #{tpu_custom_call.1} parent=63 // pred_region
          %405 = dma.done [#allocation6], 256
        $region68: #{tpu_custom_call.1} parent=63 // pred_fallthru
          _
        // Predicated region
        $region69: #{tpu_custom_call.1} parent=63 // pred_check
          %p406 = pneg %p136
        $region70: #{tpu_custom_call.1} parent=63 // pred_check_branch
          %408 = sbr.rel (%p406) target = $region72
        $region71: #{tpu_custom_call.1} parent=63 // pred_region
          %409 = dma.done [#allocation9], 256
        $region72: #{tpu_custom_call.1} parent=63 // pred_fallthru
          _
        // Predicated region
        $region73: #{tpu_custom_call.1} parent=63 // pred_check
          %p410 = pneg %p178
        $region74: #{tpu_custom_call.1} parent=63 // pred_check_branch
          %412 = sbr.rel (%p410) target = $region76
        $region75: #{tpu_custom_call.1} parent=63 // pred_region
          %413 = dma.done [#allocation9], 2048
        $region76: #{tpu_custom_call.1} parent=63 // pred_fallthru
          _
        // Predicated region
        $region77: #{tpu_custom_call.1} parent=63 // pred_check
          %p414 = pneg %p199
        $region78: #{tpu_custom_call.1} parent=63 // pred_check_branch
          %416 = sbr.rel (%p414) target = $region80
        $region79: #{tpu_custom_call.1} parent=63 // pred_region
          %417 = dma.done [#allocation12], 1024
        $region80: #{tpu_custom_call.1} parent=63 // pred_fallthru
          _
        // Predicated region
        $region81: #{tpu_custom_call.1} parent=63 // pred_check
          %p418 = pneg %p220
        $region82: #{tpu_custom_call.1} parent=63 // pred_check_branch
          %420 = sbr.rel (%p418) target = $region84
        $region83: #{tpu_custom_call.1} parent=63 // pred_region
          %421 = dma.done [#allocation12], 16
        $region84: #{tpu_custom_call.1} parent=63 // pred_fallthru
          _
        %s422 = smul.u32 4, %s26
        %p423 = scmp.lt.s32.totalorder %s422, 7
        %s424 = scalar_select %p423, %s422, 7
        %s425 = smul.addr %s424, 4
        %s426 = scalar_lea.vmem %s0, %s425
        %p427 = pneg %p47
        %p428 = pneg %p44
        %s429 = smul.u32 4, %s26
        %p430 = scmp.lt.s32.totalorder %s429, 7
        %s431 = scalar_select %p430, %s429, 7
        %s432 = smul.addr %s431, 4
        %s433 = scalar_lea.vmem %s1, %s432
        %p434 = pneg %p73
        %p435 = pneg %p70
        %p436 = pneg %p94
        %p437 = pneg %p91
        %p438 = pneg %p115
        %p439 = pneg %p112
        %p440 = pneg %p136
        %p441 = pneg %p133
        %p442 = pneg %p157
        %p443 = pneg %p154
        %p444 = pneg %p178
        %p445 = pneg %p175
        %p446 = pneg %p199
        %p447 = pneg %p196
        %p448 = pneg %p220
        %p449 = pneg %p217
        %p450 = pneg %p241
        %p451 = pneg %p238
        %p452 = pneg %p262
        %p453 = pneg %p259
        %p454 = pneg %p283
        %p455 = pneg %p280
        %s456 = smul.u32 4, %s26
        %p457 = scmp.lt.s32.totalorder %s456, 7
        %s458 = scalar_select %p457, %s456, 7
        %s459 = smul.addr %s458, 4
        %s460 = scalar_lea.vmem %s0, %s459
        %s461 = smul.u32 4, %s26
        %s462 = smul.u32 4, %s26
        %p463 = scmp.lt.s32.totalorder %s462, 7
        %s464 = scalar_select %p463, %s462, 7
        %s465 = smul.addr %s464, 4
        %s466 = scalar_lea.vmem %s1, %s465
        %s467 = smul.u32 4, %s26
        %p469 = scmp.eq.s32.totalorder %s26, 0
        // Predicated region
        $region85: #{tpu_custom_call.1} parent=63 // pred_check
          %p470 = pneg %p469
        $region86: #{tpu_custom_call.1} parent=63 // pred_check_branch
          %472 = sbr.rel (%p470) target = $region88
        $region87: #{tpu_custom_call.1} parent=63 // pred_region
          %vm473 = vcmask 523264
          %474 = vst.msk [vmem:[#allocation2] sm:$0xff] %vm473, 0.0
          %475 = vst.msk [vmem:[#allocation3] sm:$0xff] %vm473, 0.0
        $region88: #{tpu_custom_call.1} parent=63 // pred_fallthru
          _
        %v476 = vld [vmem:[%s460] sm:$0xf]
        %v477 = vld [vmem:[%s460 + $0x4] sm:$0xf]
        %v478 = vld [vmem:[%s460 + $0x8] sm:$0xf]
        %v479 = vld [vmem:[%s460 + $0xc] sm:$0xf]
        %v480 = vld [vmem:[#allocation5] sm:$0xf]
        %v481 = vld [vmem:[#allocation5 + $0x4] sm:$0xf]
        %v482 = vld [vmem:[#allocation5 + $0x8] sm:$0xf]
        %v483 = vld [vmem:[#allocation5 + $0xc] sm:$0xf]
        %v484 = vld [vmem:[%s3] sm:$0x1]
        %v486 = vlaneseq
        %v487 = vshrl.u32 %v486, 7
        %v488 = vsub.s32 0, %v487
        %v489 = vrot.slane %v484, %v488
        %v495 = vunpack.c.l.b16 %v476
        %v496 = vunpack.c.l.b16 %v477
        %v497 = vunpack.c.l.b16 %v478
        %v498 = vunpack.c.l.b16 %v479
        %v499 = vpack.c.b16 %v496, %v495
        %v500 = vpack.c.b16 %v498, %v497
        %v505 = vunpack.c.l.b16 %v480
        %v506 = vunpack.c.l.b16 %v481
        %v507 = vunpack.c.l.b16 %v482
        %v508 = vunpack.c.l.b16 %v483
        %v509 = vpack.c.b16 %v506, %v505
        %v510 = vpack.c.b16 %v508, %v507
        %vm513 = vcmask 261120
        %v515 = vsel %vm513, %v499, 0
        %v518 = vsel %vm513, %v500, 0
        %520 = vmatprep.subr.bf16.mxu0 0
        %521 = vmatpush1.bf16.msra.mxu0 %v509
        %522 = vmatprep.subr.bf16.mxu0 0
        %523 = vmatpush1.bf16.msra.mxu0 %v510
        %524 = vmatprep.subr.bf16.mxu0 0
        %525 = vmatpush1.bf16.msra.mxu0 0
        %526 = vmatprep.subr.bf16.mxu0 0
        %527 = vmatpush1.bf16.msra.mxu0 0
        %528 = vmatprep.subr.bf16.mxu0 0
        %529 = vmatpush1.bf16.msra.mxu0 0
        %530 = vmatprep.subr.bf16.mxu0 0
        %531 = vmatpush1.bf16.msra.mxu0 0
        %532 = vmatprep.subr.bf16.mxu0 0
        %533 = vmatpush1.bf16.msra.mxu0 0
        %534 = vmatprep.subr.bf16.mxu0 0
        %535 = vmatpush1.bf16.msra.mxu0 0
        %536 = vmatprep.subr.bf16.mxu0 0
        %537 = vmatpush1.bf16.msra.mxu0 0
        %538 = vmatprep.subr.bf16.mxu0 0
        %539 = vmatpush1.bf16.msra.mxu0 0
        %540 = vmatprep.subr.bf16.mxu0 0
        %541 = vmatpush1.bf16.msra.mxu0 0
        %542 = vmatprep.subr.bf16.mxu0 0
        %543 = vmatpush1.bf16.msra.mxu0 0
        %544 = vmatprep.subr.bf16.mxu0 0
        %545 = vmatpush1.bf16.msra.mxu0 0
        %546 = vmatprep.subr.bf16.mxu0 0
        %547 = vmatpush1.bf16.msra.mxu0 0
        %548 = vmatprep.subr.bf16.mxu0 0
        %549 = vmatpush1.bf16.msra.mxu0 0
        %550 = vmatprep.subr.bf16.mxu0 0
        %551 = vmatpush1.bf16.msra.mxu0 0
        %552 = vmatprep.mubr.bf16.mxu0 0
        %553 = vmatmul.mubr.bf16.gmra.mrb[0].mxu0 %v515
        %v554 = vpop.f32.mrb[0].mxu0
        %v555 = vadd.f32 %v489, %v554
        %v556 = vpop.f32.mrb[0].mxu0
        %v557 = vpop.f32.mrb[0].mxu0
        %v558 = vadd.f32 %v489, %v557
        %v559 = vpop.f32.mrb[0].mxu0
        %560 = vmatprep.mubr.bf16.mxu0 0
        %561 = vmatmul.mubr.bf16.gmra.mrb[0].mxu0 %v518
        %v562 = vpop.f32.mrb[0].mxu0
        %v563 = vadd.f32 %v489, %v562
        %v564 = vpop.f32.mrb[0].mxu0
        %v565 = vpop.f32.mrb[0].mxu0
        %v566 = vadd.f32 %v489, %v565
        %v567 = vpop.f32.mrb[0].mxu0
        %568 = vdwg.mxu0
        %v569 = vld [vmem:[%s466] sm:$0xf]
        %v570 = vld [vmem:[%s466 + $0x4] sm:$0xf]
        %v571 = vld [vmem:[%s466 + $0x8] sm:$0xf]
        %v572 = vld [vmem:[%s466 + $0xc] sm:$0xf]
        %v573 = vld [vmem:[#allocation8] sm:$0xf]
        %v574 = vld [vmem:[#allocation8 + $0x4] sm:$0xf]
        %v575 = vld [vmem:[#allocation8 + $0x8] sm:$0xf]
        %v576 = vld [vmem:[#allocation8 + $0xc] sm:$0xf]
        %v577 = vld [vmem:[%s5] sm:$0x1]
        %v579 = vlaneseq
        %v580 = vshrl.u32 %v579, 7
        %v581 = vsub.s32 0, %v580
        %v582 = vrot.slane %v577, %v581
        %v588 = vunpack.c.l.b16 %v569
        %v589 = vunpack.c.l.b16 %v570
        %v590 = vunpack.c.l.b16 %v571
        %v591 = vunpack.c.l.b16 %v572
        %v592 = vpack.c.b16 %v589, %v588
        %v593 = vpack.c.b16 %v591, %v590
        %v598 = vunpack.c.l.b16 %v573
        %v599 = vunpack.c.l.b16 %v574
        %v600 = vunpack.c.l.b16 %v575
        %v601 = vunpack.c.l.b16 %v576
        %v602 = vpack.c.b16 %v599, %v598
        %v603 = vpack.c.b16 %v601, %v600
        %v607 = vsel %vm513, %v592, 0
        %v610 = vsel %vm513, %v593, 0
        %612 = vmatprep.subr.bf16.mxu0 0
        %613 = vmatpush1.bf16.msra.mxu0 %v602
        %614 = vmatprep.subr.bf16.mxu0 0
        %615 = vmatpush1.bf16.msra.mxu0 %v603
        %616 = vmatprep.subr.bf16.mxu0 0
        %617 = vmatpush1.bf16.msra.mxu0 0
        %618 = vmatprep.subr.bf16.mxu0 0
        %619 = vmatpush1.bf16.msra.mxu0 0
        %620 = vmatprep.subr.bf16.mxu0 0
        %621 = vmatpush1.bf16.msra.mxu0 0
        %622 = vmatprep.subr.bf16.mxu0 0
        %623 = vmatpush1.bf16.msra.mxu0 0
        %624 = vmatprep.subr.bf16.mxu0 0
        %625 = vmatpush1.bf16.msra.mxu0 0
        %626 = vmatprep.subr.bf16.mxu0 0
        %627 = vmatpush1.bf16.msra.mxu0 0
        %628 = vmatprep.subr.bf16.mxu0 0
        %629 = vmatpush1.bf16.msra.mxu0 0
        %630 = vmatprep.subr.bf16.mxu0 0
        %631 = vmatpush1.bf16.msra.mxu0 0
        %632 = vmatprep.subr.bf16.mxu0 0
        %633 = vmatpush1.bf16.msra.mxu0 0
        %634 = vmatprep.subr.bf16.mxu0 0
        %635 = vmatpush1.bf16.msra.mxu0 0
        %636 = vmatprep.subr.bf16.mxu0 0
        %637 = vmatpush1.bf16.msra.mxu0 0
        %638 = vmatprep.subr.bf16.mxu0 0
        %639 = vmatpush1.bf16.msra.mxu0 0
        %640 = vmatprep.subr.bf16.mxu0 0
        %641 = vmatpush1.bf16.msra.mxu0 0
        %642 = vmatprep.subr.bf16.mxu0 0
        %643 = vmatpush1.bf16.msra.mxu0 0
        %644 = vmatprep.mubr.bf16.mxu0 0
        %645 = vmatmul.mubr.bf16.gmra.mrb[0].mxu0 %v607
        %v646 = vpop.f32.mrb[0].mxu0
        %v647 = vadd.f32 %v582, %v646
        %v648 = vpop.f32.mrb[0].mxu0
        %v649 = vpop.f32.mrb[0].mxu0
        %v650 = vadd.f32 %v582, %v649
        %v651 = vpop.f32.mrb[0].mxu0
        %652 = vmatprep.mubr.bf16.mxu0 0
        %653 = vmatmul.mubr.bf16.gmra.mrb[0].mxu0 %v610
        %v654 = vpop.f32.mrb[0].mxu0
        %v655 = vadd.f32 %v582, %v654
        %v656 = vpop.f32.mrb[0].mxu0
        %v657 = vpop.f32.mrb[0].mxu0
        %v658 = vadd.f32 %v582, %v657
        %v659 = vpop.f32.mrb[0].mxu0
        %660 = vdwg.mxu0
        %665 = vrot.lane.b32.xlu0 %v647, 32
        %v666 = vpop.permute.xlu0 %665
        %667 = vrot.lane.b32.xlu0 %v650, 32
        %v668 = vpop.permute.xlu0 %667
        %669 = vrot.lane.b32.xlu0 %v655, 32
        %v670 = vpop.permute.xlu0 %669
        %671 = vrot.lane.b32.xlu0 %v658, 32
        %v672 = vpop.permute.xlu0 %671
        %681 = vrot.lane.b32.xlu0 %v555, 32
        %v682 = vpop.permute.xlu0 %681
        %683 = vrot.lane.b32.xlu0 %v558, 32
        %v684 = vpop.permute.xlu0 %683
        %685 = vrot.lane.b32.xlu0 %v563, 32
        %v686 = vpop.permute.xlu0 %685
        %687 = vrot.lane.b32.xlu0 %v566, 32
        %v688 = vpop.permute.xlu0 %687
        %693 = vrot.lane.b32.xlu0 %v647, 64
        %v694 = vpop.permute.xlu0 %693
        %695 = vrot.lane.b32.xlu0 %v650, 64
        %v696 = vpop.permute.xlu0 %695
        %697 = vrot.lane.b32.xlu0 %v655, 64
        %v698 = vpop.permute.xlu0 %697
        %699 = vrot.lane.b32.xlu0 %v658, 64
        %v700 = vpop.permute.xlu0 %699
        %705 = vrot.lane.b32.xlu0 %v555, 64
        %v706 = vpop.permute.xlu0 %705
        %707 = vrot.lane.b32.xlu0 %v558, 64
        %v708 = vpop.permute.xlu0 %707
        %709 = vrot.lane.b32.xlu0 %v563, 64
        %v710 = vpop.permute.xlu0 %709
        %711 = vrot.lane.b32.xlu0 %v566, 64
        %v712 = vpop.permute.xlu0 %711
        %717 = vrot.lane.b32.xlu0 %v647, 96
        %v718 = vpop.permute.xlu0 %717
        %719 = vrot.lane.b32.xlu0 %v650, 96
        %v720 = vpop.permute.xlu0 %719
        %721 = vrot.lane.b32.xlu0 %v655, 96
        %v722 = vpop.permute.xlu0 %721
        %723 = vrot.lane.b32.xlu0 %v658, 96
        %v724 = vpop.permute.xlu0 %723
        %729 = vrot.lane.b32.xlu0 %v555, 96
        %v730 = vpop.permute.xlu0 %729
        %731 = vrot.lane.b32.xlu0 %v558, 96
        %v732 = vpop.permute.xlu0 %731
        %733 = vrot.lane.b32.xlu0 %v563, 96
        %v734 = vpop.permute.xlu0 %733
        %735 = vrot.lane.b32.xlu0 %v566, 96
        %v736 = vpop.permute.xlu0 %735
        %v741 = vsel %vm513, %v555, %v666
        %v742 = vsel %vm513, %v558, %v668
        %v743 = vsel %vm513, %v563, %v670
        %v744 = vsel %vm513, %v566, %v672
        %vm745 = vcmask 523264
        %v746 = vsel %vm745, %v741, %v682
        %v747 = vsel %vm745, %v742, %v684
        %v748 = vsel %vm745, %v743, %v686
        %v749 = vsel %vm745, %v744, %v688
        %vm750 = vcmask 785408
        %v751 = vsel %vm750, %v746, %v694
        %v752 = vsel %vm750, %v747, %v696
        %v753 = vsel %vm750, %v748, %v698
        %v754 = vsel %vm750, %v749, %v700
        %v755 = vsel %vm513, %v706, %v718
        %v756 = vsel %vm513, %v708, %v720
        %v757 = vsel %vm513, %v710, %v722
        %v758 = vsel %vm513, %v712, %v724
        %v759 = vsel %vm745, %v755, %v730
        %v760 = vsel %vm745, %v756, %v732
        %v761 = vsel %vm745, %v757, %v734
        %v762 = vsel %vm745, %v758, %v736
        %v763 = vsel %vm750, %v759, %v647
        %v764 = vsel %vm750, %v760, %v650
        %v765 = vsel %vm750, %v761, %v655
        %v766 = vsel %vm750, %v762, %v658
        %767 = vst [vmem:[#allocation4] sm:$0xff] %v751
        %768 = vst [vmem:[#allocation4 + $0x8] sm:$0xff] %v763
        %769 = vst [vmem:[#allocation4 + $0x10] sm:$0xff] %v752
        %770 = vst [vmem:[#allocation4 + $0x18] sm:$0xff] %v764
        %771 = vst [vmem:[#allocation4 + $0x20] sm:$0xff] %v753
        %772 = vst [vmem:[#allocation4 + $0x28] sm:$0xff] %v765
        %773 = vst [vmem:[#allocation4 + $0x30] sm:$0xff] %v754
        %774 = vst [vmem:[#allocation4 + $0x38] sm:$0xff] %v766
        %v775 = vld [vmem:[#allocation10] sm:$0xff]
        %v776 = vld [vmem:[#allocation10 + $0x8] sm:$0xff]
        %v777 = vld [vmem:[#allocation10 + $0x10] sm:$0xff]
        %v778 = vld [vmem:[#allocation10 + $0x18] sm:$0xff]
        %v779 = vld [vmem:[#allocation10 + $0x20] sm:$0xff]
        %v780 = vld [vmem:[#allocation10 + $0x28] sm:$0xff]
        %v781 = vld [vmem:[#allocation10 + $0x30] sm:$0xff]
        %v782 = vld [vmem:[#allocation10 + $0x38] sm:$0xff]
        %v783 = vld [vmem:[#allocation10 + $0x40] sm:$0xff]
        %v784 = vld [vmem:[#allocation10 + $0x48] sm:$0xff]
        %v785 = vld [vmem:[#allocation10 + $0x50] sm:$0xff]
        %v786 = vld [vmem:[#allocation10 + $0x58] sm:$0xff]
        %v787 = vld [vmem:[#allocation10 + $0x60] sm:$0xff]
        %v788 = vld [vmem:[#allocation10 + $0x68] sm:$0xff]
        %v789 = vld [vmem:[#allocation10 + $0x70] sm:$0xff]
        %v790 = vld [vmem:[#allocation10 + $0x78] sm:$0xff]
        %v791 = vld [vmem:[#allocation2] sm:$0xff]
        %v792 = vld [vmem:[#allocation3] sm:$0xff]
        %v794 = vsel %vm745, %v791, 0
        %796 = vmatprep.subr.mxu0 %v776
        %797 = vmatpush1.msra.mxu0 %v775
        %798 = vmatprep.subr.mxu0 %v778
        %799 = vmatpush1.msra.mxu0 %v777
        %800 = vmatprep.subr.mxu0 %v780
        %801 = vmatpush1.msra.mxu0 %v779
        %802 = vmatprep.subr.mxu0 %v782
        %803 = vmatpush1.msra.mxu0 %v781
        %804 = vmatprep.subr.mxu0 %v784
        %805 = vmatpush1.msra.mxu0 %v783
        %806 = vmatprep.subr.mxu0 %v786
        %807 = vmatpush1.msra.mxu0 %v785
        %808 = vmatprep.subr.mxu0 %v788
        %809 = vmatpush1.msra.mxu0 %v787
        %810 = vmatprep.subr.mxu0 %v790
        %811 = vmatpush1.msra.mxu0 %v789
        %812 = vmatprep.subr.mxu0 0.0
        %813 = vmatpush1.msra.mxu0 0.0
        %814 = vmatprep.subr.mxu0 0.0
        %815 = vmatpush1.msra.mxu0 0.0
        %816 = vmatprep.subr.mxu0 0.0
        %817 = vmatpush1.msra.mxu0 0.0
        %818 = vmatprep.subr.mxu0 0.0
        %819 = vmatpush1.msra.mxu0 0.0
        %820 = vmatprep.subr.mxu0 0.0
        %821 = vmatpush1.msra.mxu0 0.0
        %822 = vmatprep.subr.mxu0 0.0
        %823 = vmatpush1.msra.mxu0 0.0
        %824 = vmatprep.subr.mxu0 0.0
        %825 = vmatpush1.msra.mxu0 0.0
        %826 = vmatprep.subr.mxu0 0.0
        %827 = vmatpush1.msra.mxu0 0.0
        %828 = vmatprep.subr.mxu0 0.0
        %829 = vmatpush1.msra.mxu0 0.0
        %830 = vmatprep.subr.mxu0 0.0
        %831 = vmatpush1.msra.mxu0 0.0
        %832 = vmatprep.subr.mxu0 0.0
        %833 = vmatpush1.msra.mxu0 0.0
        %834 = vmatprep.subr.mxu0 0.0
        %835 = vmatpush1.msra.mxu0 0.0
        %836 = vmatprep.subr.mxu0 0.0
        %837 = vmatpush1.msra.mxu0 0.0
        %838 = vmatprep.subr.mxu0 0.0
        %839 = vmatpush1.msra.mxu0 0.0
        %840 = vmatprep.subr.mxu0 0.0
        %841 = vmatpush1.msra.mxu0 0.0
        %842 = vmatprep.subr.mxu0 0.0
        %843 = vmatpush1.msra.mxu0 0.0
        %844 = vmatprep.subr.mxu0 0.0
        %845 = vmatpush1.msra.mxu0 0.0
        %846 = vmatprep.subr.mxu0 0.0
        %847 = vmatpush1.msra.mxu0 0.0
        %848 = vmatprep.subr.mxu0 0.0
        %849 = vmatpush1.msra.mxu0 0.0
        %850 = vmatprep.subr.mxu0 0.0
        %851 = vmatpush1.msra.mxu0 0.0
        %852 = vmatprep.subr.mxu0 0.0
        %853 = vmatpush1.msra.mxu0 0.0
        %854 = vmatprep.subr.mxu0 0.0
        %855 = vmatpush1.msra.mxu0 0.0
        %856 = vmatprep.subr.mxu0 0.0
        %857 = vmatpush1.msra.mxu0 0.0
        %858 = vmatprep.subr.mxu0 0.0
        %859 = vmatpush1.msra.mxu0 0.0
        %860 = vmatprep.mubr.f32.mxu0 0.0
        %861 = vmatmul.mubr.f32.gmra.mrb[0].mxu0 %v794
        %v862 = vpop.f32.mrb[0].mxu0
        %v863 = vadd.f32 0.0, %v862
        %v864 = vpop.f32.mrb[0].mxu0
        %v865 = vadd.f32 0.0, %v864
        %866 = vdwg.mxu0
        %s867 = smul.u32 0, 2
        %s868 = smul.addr %s867, 8
        %s869 = scalar_lea.vmem [#allocation4], %s868
        %v870 = vld [vmem:[%s869] sm:$0xff]
        %v871 = vld [vmem:[%s869 + $0x8] sm:$0xff]
        %v872 = vadd.f32 %v870, %v863
        %v873 = vadd.f32 %v871, %v865
        %v874 = vxor.u32 %v872, 2147483648
        %v875 = vxor.u32 %v873, 2147483648
        %v876 = vmul.f32 %v874, 1.442695
        %v877 = vpow.pop %v876
        %v878 = vmul.f32 %v875, 1.442695
        %v879 = vpow.pop %v878
        %v880 = vadd.f32 %v877, 1.0
        %v881 = vadd.f32 %v879, 1.0
        %v882 = vrcp.pop %v880
        %v883 = vmul.f32 1.0, %v882
        %v884 = vrcp.pop %v881
        %v885 = vmul.f32 1.0, %v884
        %v886 = vtanh.pop %v873
        %888 = vrot.lane.b32.xlu0 %v792, 64
        %v889 = vpop.permute.xlu0 %888
        %v891 = vmul.f32 %v883, %v889
        %893 = vrot.lane.b32.xlu0 %v886, 64
        %v894 = vpop.permute.xlu0 %893
        %v896 = vmul.f32 %v883, %v894
        %898 = vrot.lane.b32.xlu0 %v896, 64
        %v899 = vpop.permute.xlu0 %898
        %v901 = vadd.f32 %v891, %v899
        %v902 = vtanh.pop %v901
        %904 = vrot.lane.b32.xlu0 %v902, 64
        %v905 = vpop.permute.xlu0 %904
        %v907 = vmul.f32 %v885, %v905
        %v909 = vsel %vm745, %v907, 0
        %911 = vmatprep.subr.mxu0 %v776
        %912 = vmatpush1.msra.mxu0 %v775
        %913 = vmatprep.subr.mxu0 %v778
        %914 = vmatpush1.msra.mxu0 %v777
        %915 = vmatprep.subr.mxu0 %v780
        %916 = vmatpush1.msra.mxu0 %v779
        %917 = vmatprep.subr.mxu0 %v782
        %918 = vmatpush1.msra.mxu0 %v781
        %919 = vmatprep.subr.mxu0 %v784
        %920 = vmatpush1.msra.mxu0 %v783
        %921 = vmatprep.subr.mxu0 %v786
        %922 = vmatpush1.msra.mxu0 %v785
        %923 = vmatprep.subr.mxu0 %v788
        %924 = vmatpush1.msra.mxu0 %v787
        %925 = vmatprep.subr.mxu0 %v790
        %926 = vmatpush1.msra.mxu0 %v789
        %927 = vmatprep.subr.mxu0 0.0
        %928 = vmatpush1.msra.mxu0 0.0
        %929 = vmatprep.subr.mxu0 0.0
        %930 = vmatpush1.msra.mxu0 0.0
        %931 = vmatprep.subr.mxu0 0.0
        %932 = vmatpush1.msra.mxu0 0.0
        %933 = vmatprep.subr.mxu0 0.0
        %934 = vmatpush1.msra.mxu0 0.0
        %935 = vmatprep.subr.mxu0 0.0
        %936 = vmatpush1.msra.mxu0 0.0
        %937 = vmatprep.subr.mxu0 0.0
        %938 = vmatpush1.msra.mxu0 0.0
        %939 = vmatprep.subr.mxu0 0.0
        %940 = vmatpush1.msra.mxu0 0.0
        %941 = vmatprep.subr.mxu0 0.0
        %942 = vmatpush1.msra.mxu0 0.0
        %943 = vmatprep.subr.mxu0 0.0
        %944 = vmatpush1.msra.mxu0 0.0
        %945 = vmatprep.subr.mxu0 0.0
        %946 = vmatpush1.msra.mxu0 0.0
        %947 = vmatprep.subr.mxu0 0.0
        %948 = vmatpush1.msra.mxu0 0.0
        %949 = vmatprep.subr.mxu0 0.0
        %950 = vmatpush1.msra.mxu0 0.0
        %951 = vmatprep.subr.mxu0 0.0
        %952 = vmatpush1.msra.mxu0 0.0
        %953 = vmatprep.subr.mxu0 0.0
        %954 = vmatpush1.msra.mxu0 0.0
        %955 = vmatprep.subr.mxu0 0.0
        %956 = vmatpush1.msra.mxu0 0.0
        %957 = vmatprep.subr.mxu0 0.0
        %958 = vmatpush1.msra.mxu0 0.0
        %959 = vmatprep.subr.mxu0 0.0
        %960 = vmatpush1.msra.mxu0 0.0
        %961 = vmatprep.subr.mxu0 0.0
        %962 = vmatpush1.msra.mxu0 0.0
        %963 = vmatprep.subr.mxu0 0.0
        %964 = vmatpush1.msra.mxu0 0.0
        %965 = vmatprep.subr.mxu0 0.0
        %966 = vmatpush1.msra.mxu0 0.0
        %967 = vmatprep.subr.mxu0 0.0
        %968 = vmatpush1.msra.mxu0 0.0
        %969 = vmatprep.subr.mxu0 0.0
        %970 = vmatpush1.msra.mxu0 0.0
        %971 = vmatprep.subr.mxu0 0.0
        %972 = vmatpush1.msra.mxu0 0.0
        %973 = vmatprep.subr.mxu0 0.0
        %974 = vmatpush1.msra.mxu0 0.0
        %975 = vmatprep.mubr.f32.mxu0 0.0
        %976 = vmatmul.mubr.f32.gmra.mrb[0].mxu0 %v909
        %v977 = vpop.f32.mrb[0].mxu0
        %v978 = vadd.f32 0.0, %v977
        %v979 = vpop.f32.mrb[0].mxu0
        %v980 = vadd.f32 0.0, %v979
        %981 = vdwg.mxu0
        %s982 = smul.u32 1, 2
        %s983 = smul.addr %s982, 8
        %s984 = scalar_lea.vmem [#allocation4], %s983
        %v985 = vld [vmem:[%s984] sm:$0xff]
        %v986 = vld [vmem:[%s984 + $0x8] sm:$0xff]
        %v987 = vadd.f32 %v985, %v978
        %v988 = vadd.f32 %v986, %v980
        %v989 = vxor.u32 %v987, 2147483648
        %v990 = vxor.u32 %v988, 2147483648
        %v991 = vmul.f32 %v989, 1.442695
        %v992 = vpow.pop %v991
        %v993 = vmul.f32 %v990, 1.442695
        %v994 = vpow.pop %v993
        %v995 = vadd.f32 %v992, 1.0
        %v996 = vadd.f32 %v994, 1.0
        %v997 = vrcp.pop %v995
        %v998 = vmul.f32 1.0, %v997
        %v999 = vrcp.pop %v996
        %v1000 = vmul.f32 1.0, %v999
        %v1001 = vtanh.pop %v988
        %v1002 = vmul.f32 %v998, %v901
        %1004 = vrot.lane.b32.xlu0 %v1001, 64
        %v1005 = vpop.permute.xlu0 %1004
        %v1007 = vmul.f32 %v998, %v1005
        %1009 = vrot.lane.b32.xlu0 %v1007, 64
        %v1010 = vpop.permute.xlu0 %1009
        %v1012 = vadd.f32 %v1002, %v1010
        %v1013 = vtanh.pop %v1012
        %1015 = vrot.lane.b32.xlu0 %v1013, 64
        %v1016 = vpop.permute.xlu0 %1015
        %v1018 = vmul.f32 %v1000, %v1016
        %v1020 = vsel %vm745, %v1018, 0
        %1022 = vmatprep.subr.mxu0 %v776
        %1023 = vmatpush1.msra.mxu0 %v775
        %1024 = vmatprep.subr.mxu0 %v778
        %1025 = vmatpush1.msra.mxu0 %v777
        %1026 = vmatprep.subr.mxu0 %v780
        %1027 = vmatpush1.msra.mxu0 %v779
        %1028 = vmatprep.subr.mxu0 %v782
        %1029 = vmatpush1.msra.mxu0 %v781
        %1030 = vmatprep.subr.mxu0 %v784
        %1031 = vmatpush1.msra.mxu0 %v783
        %1032 = vmatprep.subr.mxu0 %v786
        %1033 = vmatpush1.msra.mxu0 %v785
        %1034 = vmatprep.subr.mxu0 %v788
        %1035 = vmatpush1.msra.mxu0 %v787
        %1036 = vmatprep.subr.mxu0 %v790
        %1037 = vmatpush1.msra.mxu0 %v789
        %1038 = vmatprep.subr.mxu0 0.0
        %1039 = vmatpush1.msra.mxu0 0.0
        %1040 = vmatprep.subr.mxu0 0.0
        %1041 = vmatpush1.msra.mxu0 0.0
        %1042 = vmatprep.subr.mxu0 0.0
        %1043 = vmatpush1.msra.mxu0 0.0
        %1044 = vmatprep.subr.mxu0 0.0
        %1045 = vmatpush1.msra.mxu0 0.0
        %1046 = vmatprep.subr.mxu0 0.0
        %1047 = vmatpush1.msra.mxu0 0.0
        %1048 = vmatprep.subr.mxu0 0.0
        %1049 = vmatpush1.msra.mxu0 0.0
        %1050 = vmatprep.subr.mxu0 0.0
        %1051 = vmatpush1.msra.mxu0 0.0
        %1052 = vmatprep.subr.mxu0 0.0
        %1053 = vmatpush1.msra.mxu0 0.0
        %1054 = vmatprep.subr.mxu0 0.0
        %1055 = vmatpush1.msra.mxu0 0.0
        %1056 = vmatprep.subr.mxu0 0.0
        %1057 = vmatpush1.msra.mxu0 0.0
        %1058 = vmatprep.subr.mxu0 0.0
        %1059 = vmatpush1.msra.mxu0 0.0
        %1060 = vmatprep.subr.mxu0 0.0
        %1061 = vmatpush1.msra.mxu0 0.0
        %1062 = vmatprep.subr.mxu0 0.0
        %1063 = vmatpush1.msra.mxu0 0.0
        %1064 = vmatprep.subr.mxu0 0.0
        %1065 = vmatpush1.msra.mxu0 0.0
        %1066 = vmatprep.subr.mxu0 0.0
        %1067 = vmatpush1.msra.mxu0 0.0
        %1068 = vmatprep.subr.mxu0 0.0
        %1069 = vmatpush1.msra.mxu0 0.0
        %1070 = vmatprep.subr.mxu0 0.0
        %1071 = vmatpush1.msra.mxu0 0.0
        %1072 = vmatprep.subr.mxu0 0.0
        %1073 = vmatpush1.msra.mxu0 0.0
        %1074 = vmatprep.subr.mxu0 0.0
        %1075 = vmatpush1.msra.mxu0 0.0
        %1076 = vmatprep.subr.mxu0 0.0
        %1077 = vmatpush1.msra.mxu0 0.0
        %1078 = vmatprep.subr.mxu0 0.0
        %1079 = vmatpush1.msra.mxu0 0.0
        %1080 = vmatprep.subr.mxu0 0.0
        %1081 = vmatpush1.msra.mxu0 0.0
        %1082 = vmatprep.subr.mxu0 0.0
        %1083 = vmatpush1.msra.mxu0 0.0
        %1084 = vmatprep.subr.mxu0 0.0
        %1085 = vmatpush1.msra.mxu0 0.0
        %1086 = vmatprep.mubr.f32.mxu0 0.0
        %1087 = vmatmul.mubr.f32.gmra.mrb[0].mxu0 %v1020
        %v1088 = vpop.f32.mrb[0].mxu0
        %v1089 = vadd.f32 0.0, %v1088
        %v1090 = vpop.f32.mrb[0].mxu0
        %v1091 = vadd.f32 0.0, %v1090
        %1092 = vdwg.mxu0
        %s1093 = smul.u32 2, 2
        %s1094 = smul.addr %s1093, 8
        %s1095 = scalar_lea.vmem [#allocation4], %s1094
        %v1096 = vld [vmem:[%s1095] sm:$0xff]
        %v1097 = vld [vmem:[%s1095 + $0x8] sm:$0xff]
        %v1098 = vadd.f32 %v1096, %v1089
        %v1099 = vadd.f32 %v1097, %v1091
        %v1100 = vxor.u32 %v1098, 2147483648
        %v1101 = vxor.u32 %v1099, 2147483648
        %v1102 = vmul.f32 %v1100, 1.442695
        %v1103 = vpow.pop %v1102
        %v1104 = vmul.f32 %v1101, 1.442695
        %v1105 = vpow.pop %v1104
        %v1106 = vadd.f32 %v1103, 1.0
        %v1107 = vadd.f32 %v1105, 1.0
        %v1108 = vrcp.pop %v1106
        %v1109 = vmul.f32 1.0, %v1108
        %v1110 = vrcp.pop %v1107
        %v1111 = vmul.f32 1.0, %v1110
        %v1112 = vtanh.pop %v1099
        %v1113 = vmul.f32 %v1109, %v1012
        %1115 = vrot.lane.b32.xlu0 %v1112, 64
        %v1116 = vpop.permute.xlu0 %1115
        %v1118 = vmul.f32 %v1109, %v1116
        %1120 = vrot.lane.b32.xlu0 %v1118, 64
        %v1121 = vpop.permute.xlu0 %1120
        %v1123 = vadd.f32 %v1113, %v1121
        %v1124 = vtanh.pop %v1123
        %1126 = vrot.lane.b32.xlu0 %v1124, 64
        %v1127 = vpop.permute.xlu0 %1126
        %v1129 = vmul.f32 %v1111, %v1127
        %v1131 = vsel %vm745, %v1129, 0
        %1133 = vmatprep.subr.mxu0 %v776
        %1134 = vmatpush1.msra.mxu0 %v775
        %1135 = vmatprep.subr.mxu0 %v778
        %1136 = vmatpush1.msra.mxu0 %v777
        %1137 = vmatprep.subr.mxu0 %v780
        %1138 = vmatpush1.msra.mxu0 %v779
        %1139 = vmatprep.subr.mxu0 %v782
        %1140 = vmatpush1.msra.mxu0 %v781
        %1141 = vmatprep.subr.mxu0 %v784
        %1142 = vmatpush1.msra.mxu0 %v783
        %1143 = vmatprep.subr.mxu0 %v786
        %1144 = vmatpush1.msra.mxu0 %v785
        %1145 = vmatprep.subr.mxu0 %v788
        %1146 = vmatpush1.msra.mxu0 %v787
        %1147 = vmatprep.subr.mxu0 %v790
        %1148 = vmatpush1.msra.mxu0 %v789
        %1149 = vmatprep.subr.mxu0 0.0
        %1150 = vmatpush1.msra.mxu0 0.0
        %1151 = vmatprep.subr.mxu0 0.0
        %1152 = vmatpush1.msra.mxu0 0.0
        %1153 = vmatprep.subr.mxu0 0.0
        %1154 = vmatpush1.msra.mxu0 0.0
        %1155 = vmatprep.subr.mxu0 0.0
        %1156 = vmatpush1.msra.mxu0 0.0
        %1157 = vmatprep.subr.mxu0 0.0
        %1158 = vmatpush1.msra.mxu0 0.0
        %1159 = vmatprep.subr.mxu0 0.0
        %1160 = vmatpush1.msra.mxu0 0.0
        %1161 = vmatprep.subr.mxu0 0.0
        %1162 = vmatpush1.msra.mxu0 0.0
        %1163 = vmatprep.subr.mxu0 0.0
        %1164 = vmatpush1.msra.mxu0 0.0
        %1165 = vmatprep.subr.mxu0 0.0
        %1166 = vmatpush1.msra.mxu0 0.0
        %1167 = vmatprep.subr.mxu0 0.0
        %1168 = vmatpush1.msra.mxu0 0.0
        %1169 = vmatprep.subr.mxu0 0.0
        %1170 = vmatpush1.msra.mxu0 0.0
        %1171 = vmatprep.subr.mxu0 0.0
        %1172 = vmatpush1.msra.mxu0 0.0
        %1173 = vmatprep.subr.mxu0 0.0
        %1174 = vmatpush1.msra.mxu0 0.0
        %1175 = vmatprep.subr.mxu0 0.0
        %1176 = vmatpush1.msra.mxu0 0.0
        %1177 = vmatprep.subr.mxu0 0.0
        %1178 = vmatpush1.msra.mxu0 0.0
        %1179 = vmatprep.subr.mxu0 0.0
        %1180 = vmatpush1.msra.mxu0 0.0
        %1181 = vmatprep.subr.mxu0 0.0
        %1182 = vmatpush1.msra.mxu0 0.0
        %1183 = vmatprep.subr.mxu0 0.0
        %1184 = vmatpush1.msra.mxu0 0.0
        %1185 = vmatprep.subr.mxu0 0.0
        %1186 = vmatpush1.msra.mxu0 0.0
        %1187 = vmatprep.subr.mxu0 0.0
        %1188 = vmatpush1.msra.mxu0 0.0
        %1189 = vmatprep.subr.mxu0 0.0
        %1190 = vmatpush1.msra.mxu0 0.0
        %1191 = vmatprep.subr.mxu0 0.0
        %1192 = vmatpush1.msra.mxu0 0.0
        %1193 = vmatprep.subr.mxu0 0.0
        %1194 = vmatpush1.msra.mxu0 0.0
        %1195 = vmatprep.subr.mxu0 0.0
        %1196 = vmatpush1.msra.mxu0 0.0
        %1197 = vmatprep.mubr.f32.mxu0 0.0
        %1198 = vmatmul.mubr.f32.gmra.mrb[0].mxu0 %v1131
        %v1199 = vpop.f32.mrb[0].mxu0
        %v1200 = vadd.f32 0.0, %v1199
        %v1201 = vpop.f32.mrb[0].mxu0
        %v1202 = vadd.f32 0.0, %v1201
        %1203 = vdwg.mxu0
        %s1204 = smul.u32 3, 2
        %s1205 = smul.addr %s1204, 8
        %s1206 = scalar_lea.vmem [#allocation4], %s1205
        %v1207 = vld [vmem:[%s1206] sm:$0xff]
        %v1208 = vld [vmem:[%s1206 + $0x8] sm:$0xff]
        %v1209 = vadd.f32 %v1207, %v1200
        %v1210 = vadd.f32 %v1208, %v1202
        %v1211 = vxor.u32 %v1209, 2147483648
        %v1212 = vxor.u32 %v1210, 2147483648
        %v1213 = vmul.f32 %v1211, 1.442695
        %v1214 = vpow.pop %v1213
        %v1215 = vmul.f32 %v1212, 1.442695
        %v1216 = vpow.pop %v1215
        %v1217 = vadd.f32 %v1214, 1.0
        %v1218 = vadd.f32 %v1216, 1.0
        %v1219 = vrcp.pop %v1217
        %v1220 = vmul.f32 1.0, %v1219
        %v1221 = vrcp.pop %v1218
        %v1222 = vmul.f32 1.0, %v1221
        %v1223 = vtanh.pop %v1210
        %v1224 = vmul.f32 %v1220, %v1123
        %1226 = vrot.lane.b32.xlu0 %v1223, 64
        %v1227 = vpop.permute.xlu0 %1226
        %v1229 = vmul.f32 %v1220, %v1227
        %1231 = vrot.lane.b32.xlu0 %v1229, 64
        %v1232 = vpop.permute.xlu0 %1231
        %v1234 = vadd.f32 %v1224, %v1232
        %v1235 = vtanh.pop %v1234
        %1237 = vrot.lane.b32.xlu0 %v1235, 64
        %v1238 = vpop.permute.xlu0 %1237
        %v1240 = vmul.f32 %v1222, %v1238
        %1241 = vst.msk [vmem:[#allocation2] sm:$0xff] %vm745, %v1240
        %1243 = vrot.lane.b32.xlu0 %v1234, 64
        %v1244 = vpop.permute.xlu0 %1243
        %1246 = vst.msk [vmem:[#allocation3] sm:$0xff] %vm745, %v1244
        %p1247 = scmp.eq.s32.totalorder %s26, 1
        // Predicated region
        $region89: #{tpu_custom_call.1} parent=63 // pred_check
          %p1248 = pneg %p1247
        $region90: #{tpu_custom_call.1} parent=63 // pred_check_branch
          %1250 = sbr.rel (%p1248) target = $region92
        $region91: #{tpu_custom_call.1} parent=63 // pred_region
          %v1251 = vld [vmem:[#allocation11] sm:$0xff]
          %v1252 = vld [vmem:[#allocation11 + $0x8] sm:$0xff]
          %v1253 = vld [vmem:[#allocation11 + $0x10] sm:$0xff]
          %v1254 = vld [vmem:[#allocation11 + $0x18] sm:$0xff]
          %v1255 = vld [vmem:[#allocation11 + $0x20] sm:$0xff]
          %v1256 = vld [vmem:[#allocation11 + $0x28] sm:$0xff]
          %v1257 = vld [vmem:[#allocation11 + $0x30] sm:$0xff]
          %v1258 = vld [vmem:[#allocation11 + $0x38] sm:$0xff]
          %v1259 = vld [vmem:[#allocation13] sm:$0x1]
          %v1261 = vlaneseq
          %v1262 = vshrl.u32 %v1261, 7
          %v1263 = vsub.s32 0, %v1262
          %v1264 = vrot.slane %v1259, %v1263
          %v1267 = vsel %vm745, %v1240, 0
          %1269 = vmatprep.subr.mxu0 0.0
          %1270 = vmatpush1.msra.mxu0 %v1251
          %1271 = vmatprep.subr.mxu0 0.0
          %1272 = vmatpush1.msra.mxu0 %v1252
          %1273 = vmatprep.subr.mxu0 0.0
          %1274 = vmatpush1.msra.mxu0 %v1253
          %1275 = vmatprep.subr.mxu0 0.0
          %1276 = vmatpush1.msra.mxu0 %v1254
          %1277 = vmatprep.subr.mxu0 0.0
          %1278 = vmatpush1.msra.mxu0 %v1255
          %1279 = vmatprep.subr.mxu0 0.0
          %1280 = vmatpush1.msra.mxu0 %v1256
          %1281 = vmatprep.subr.mxu0 0.0
          %1282 = vmatpush1.msra.mxu0 %v1257
          %1283 = vmatprep.subr.mxu0 0.0
          %1284 = vmatpush1.msra.mxu0 %v1258
          %1285 = vmatprep.subr.mxu0 0.0
          %1286 = vmatpush1.msra.mxu0 0.0
          %1287 = vmatprep.subr.mxu0 0.0
          %1288 = vmatpush1.msra.mxu0 0.0
          %1289 = vmatprep.subr.mxu0 0.0
          %1290 = vmatpush1.msra.mxu0 0.0
          %1291 = vmatprep.subr.mxu0 0.0
          %1292 = vmatpush1.msra.mxu0 0.0
          %1293 = vmatprep.subr.mxu0 0.0
          %1294 = vmatpush1.msra.mxu0 0.0
          %1295 = vmatprep.subr.mxu0 0.0
          %1296 = vmatpush1.msra.mxu0 0.0
          %1297 = vmatprep.subr.mxu0 0.0
          %1298 = vmatpush1.msra.mxu0 0.0
          %1299 = vmatprep.subr.mxu0 0.0
          %1300 = vmatpush1.msra.mxu0 0.0
          %1301 = vmatprep.subr.mxu0 0.0
          %1302 = vmatpush1.msra.mxu0 0.0
          %1303 = vmatprep.subr.mxu0 0.0
          %1304 = vmatpush1.msra.mxu0 0.0
          %1305 = vmatprep.subr.mxu0 0.0
          %1306 = vmatpush1.msra.mxu0 0.0
          %1307 = vmatprep.subr.mxu0 0.0
          %1308 = vmatpush1.msra.mxu0 0.0
          %1309 = vmatprep.subr.mxu0 0.0
          %1310 = vmatpush1.msra.mxu0 0.0
          %1311 = vmatprep.subr.mxu0 0.0
          %1312 = vmatpush1.msra.mxu0 0.0
          %1313 = vmatprep.subr.mxu0 0.0
          %1314 = vmatpush1.msra.mxu0 0.0
          %1315 = vmatprep.subr.mxu0 0.0
          %1316 = vmatpush1.msra.mxu0 0.0
          %1317 = vmatprep.subr.mxu0 0.0
          %1318 = vmatpush1.msra.mxu0 0.0
          %1319 = vmatprep.subr.mxu0 0.0
          %1320 = vmatpush1.msra.mxu0 0.0
          %1321 = vmatprep.subr.mxu0 0.0
          %1322 = vmatpush1.msra.mxu0 0.0
          %1323 = vmatprep.subr.mxu0 0.0
          %1324 = vmatpush1.msra.mxu0 0.0
          %1325 = vmatprep.subr.mxu0 0.0
          %1326 = vmatpush1.msra.mxu0 0.0
          %1327 = vmatprep.subr.mxu0 0.0
          %1328 = vmatpush1.msra.mxu0 0.0
          %1329 = vmatprep.subr.mxu0 0.0
          %1330 = vmatpush1.msra.mxu0 0.0
          %1331 = vmatprep.subr.mxu0 0.0
          %1332 = vmatpush1.msra.mxu0 0.0
          %1333 = vmatprep.mubr.f32.mxu0 0.0
          %1334 = vmatmul.mubr.f32.gmra.mrb[0].mxu0 %v1267
          %v1335 = vpop.f32.mrb[0].mxu0
          %v1336 = vadd.f32 %v1264, %v1335
          %v1337 = vpop.f32.mrb[0].mxu0
          %1338 = vdwg.mxu0
          %v1339 = vmax.f32 %v1336, 0.0
          %v1340 = vld [vmem:[%s9] sm:$0xff]
          %v1341 = vld [vmem:[%s9 + $0x8] sm:$0xff]
          %v1342 = vld [vmem:[%s9 + $0x10] sm:$0xff]
          %v1343 = vld [vmem:[%s9 + $0x18] sm:$0xff]
          %v1344 = vld [vmem:[%s9 + $0x20] sm:$0xff]
          %v1345 = vld [vmem:[%s9 + $0x28] sm:$0xff]
          %v1346 = vld [vmem:[%s9 + $0x30] sm:$0xff]
          %v1347 = vld [vmem:[%s9 + $0x38] sm:$0xff]
          %v1348 = vld [vmem:[%s9 + $0x40] sm:$0xff]
          %v1349 = vld [vmem:[%s9 + $0x48] sm:$0xff]
          %v1350 = vld [vmem:[%s9 + $0x50] sm:$0xff]
          %v1351 = vld [vmem:[%s9 + $0x58] sm:$0xff]
          %v1352 = vld [vmem:[%s9 + $0x60] sm:$0xff]
          %v1353 = vld [vmem:[%s9 + $0x68] sm:$0xff]
          %v1354 = vld [vmem:[%s9 + $0x70] sm:$0xff]
          %v1355 = vld [vmem:[%s9 + $0x78] sm:$0xff]
          %v1356 = vld [vmem:[%s10] sm:$0x1]
          %v1358 = vlaneseq
          %v1359 = vshrl.u32 %v1358, 7
          %v1360 = vsub.s32 0, %v1359
          %v1361 = vrot.slane %v1356, %v1360
          %1363 = vmatprep.subr.mxu0 0.0
          %1364 = vmatpush1.msra.mxu0 %v1340
          %1365 = vmatprep.subr.mxu0 0.0
          %1366 = vmatpush1.msra.mxu0 %v1341
          %1367 = vmatprep.subr.mxu0 0.0
          %1368 = vmatpush1.msra.mxu0 %v1342
          %1369 = vmatprep.subr.mxu0 0.0
          %1370 = vmatpush1.msra.mxu0 %v1343
          %1371 = vmatprep.subr.mxu0 0.0
          %1372 = vmatpush1.msra.mxu0 %v1344
          %1373 = vmatprep.subr.mxu0 0.0
          %1374 = vmatpush1.msra.mxu0 %v1345
          %1375 = vmatprep.subr.mxu0 0.0
          %1376 = vmatpush1.msra.mxu0 %v1346
          %1377 = vmatprep.subr.mxu0 0.0
          %1378 = vmatpush1.msra.mxu0 %v1347
          %1379 = vmatprep.subr.mxu0 0.0
          %1380 = vmatpush1.msra.mxu0 %v1348
          %1381 = vmatprep.subr.mxu0 0.0
          %1382 = vmatpush1.msra.mxu0 %v1349
          %1383 = vmatprep.subr.mxu0 0.0
          %1384 = vmatpush1.msra.mxu0 %v1350
          %1385 = vmatprep.subr.mxu0 0.0
          %1386 = vmatpush1.msra.mxu0 %v1351
          %1387 = vmatprep.subr.mxu0 0.0
          %1388 = vmatpush1.msra.mxu0 %v1352
          %1389 = vmatprep.subr.mxu0 0.0
          %1390 = vmatpush1.msra.mxu0 %v1353
          %1391 = vmatprep.subr.mxu0 0.0
          %1392 = vmatpush1.msra.mxu0 %v1354
          %1393 = vmatprep.subr.mxu0 0.0
          %1394 = vmatpush1.msra.mxu0 %v1355
          %1395 = vmatprep.subr.mxu0 0.0
          %1396 = vmatpush1.msra.mxu0 0.0
          %1397 = vmatprep.subr.mxu0 0.0
          %1398 = vmatpush1.msra.mxu0 0.0
          %1399 = vmatprep.subr.mxu0 0.0
          %1400 = vmatpush1.msra.mxu0 0.0
          %1401 = vmatprep.subr.mxu0 0.0
          %1402 = vmatpush1.msra.mxu0 0.0
          %1403 = vmatprep.subr.mxu0 0.0
          %1404 = vmatpush1.msra.mxu0 0.0
          %1405 = vmatprep.subr.mxu0 0.0
          %1406 = vmatpush1.msra.mxu0 0.0
          %1407 = vmatprep.subr.mxu0 0.0
          %1408 = vmatpush1.msra.mxu0 0.0
          %1409 = vmatprep.subr.mxu0 0.0
          %1410 = vmatpush1.msra.mxu0 0.0
          %1411 = vmatprep.subr.mxu0 0.0
          %1412 = vmatpush1.msra.mxu0 0.0
          %1413 = vmatprep.subr.mxu0 0.0
          %1414 = vmatpush1.msra.mxu0 0.0
          %1415 = vmatprep.subr.mxu0 0.0
          %1416 = vmatpush1.msra.mxu0 0.0
          %1417 = vmatprep.subr.mxu0 0.0
          %1418 = vmatpush1.msra.mxu0 0.0
          %1419 = vmatprep.subr.mxu0 0.0
          %1420 = vmatpush1.msra.mxu0 0.0
          %1421 = vmatprep.subr.mxu0 0.0
          %1422 = vmatpush1.msra.mxu0 0.0
          %1423 = vmatprep.subr.mxu0 0.0
          %1424 = vmatpush1.msra.mxu0 0.0
          %1425 = vmatprep.subr.mxu0 0.0
          %1426 = vmatpush1.msra.mxu0 0.0
          %1427 = vmatprep.mubr.f32.mxu0 0.0
          %1428 = vmatmul.mubr.f32.gmra.mrb[0].mxu0 %v1339
          %v1429 = vpop.f32.mrb[0].mxu0
          %v1430 = vadd.f32 %v1361, %v1429
          %v1431 = vpop.f32.mrb[0].mxu0
          %1432 = vdwg.mxu0
          %1433 = vst [vmem:[#allocation14] sm:$0xff] %v1430
        $region92: #{tpu_custom_call.1} parent=63 // pred_fallthru
          _
        // Predicated region
        $region93: #{tpu_custom_call.1} parent=63 // pred_check
          %p1434 = pneg %p280
        $region94: #{tpu_custom_call.1} parent=63 // pred_check_branch
          %1436 = sbr.rel (%p1434) target = $region96
        $region95: #{tpu_custom_call.1} parent=63 // pred_region
          %s1438 = ssub.s32 128, 128
          %1439 = vsyncadd [#allocation7], %s1438
          %s1441 = sshll.u32 [#allocation14], 4
          %s1442 = int_to_ptr.vmem [resolvable:$true] %s1441
          %1444 = dma.vmem_to_hbm [thread:$0]  %s1442, 128, %s11, [#allocation7]
        $region96: #{tpu_custom_call.1} parent=63 // pred_fallthru
          _
        // Predicated region
        $region97: #{tpu_custom_call.1} parent=63 // pred_check
          %p1445 = pneg %p280
        $region98: #{tpu_custom_call.1} parent=63 // pred_check_branch
          %1447 = sbr.rel (%p1445) target = $region100
        $region99: #{tpu_custom_call.1} parent=63 // pred_region
          %1448 = dma.done [#allocation7], 128
        $region100: #{tpu_custom_call.1} parent=63 // pred_fallthru
          _
      $region64: #{tpu_custom_call.1} parent=5 // pred_fallthru
        _
      %p1449 = scmp.le.s32.totalorder 2, %s21
      // Predicated region
      $region101: #{tpu_custom_call.1} parent=5 // pred_check
        %p1450 = pneg %p1449
      $region102: #{tpu_custom_call.1} parent=5 // pred_check_branch
        %1452 = sbr.rel (%p1450) target = $region104
      $region103: #{tpu_custom_call.1} parent=5 // pred_region
        %s1453 = ssub.s32 %s21, 2
      $region104: #{tpu_custom_call.1} parent=5 // pred_fallthru
        _
    $region6: #{tpu_custom_call.1} parent=1 // loop_footer
      %s25 = sadd.s32 1, %s21
    $region7: #{tpu_custom_call.1} parent=1 // loop_footer_branch
      %20 = sbr.rel target = $region3
    $region8: #{tpu_custom_call.1} parent=1 // loop_exit
      _
    %1454 = vsyncpa [#allocation6], 1
    %s1455 = scalar_lea.sflag [#allocation6], 1
    %1456 = vsyncpa %s1455, 1
    %1457 = vsyncpa [#allocation9], 1
    %1458 = vsyncpa [#allocation12], 1
    %1459 = vsyncpa [#allocation7], 1
    %s1460 = scalar_lea.sflag [#allocation7], 1
    %1461 = vsyncpa %s1460, 1

</llo_original>
